<compile_context>
chip_gen: v5e
topology: v5e:2x2
jax: 0.10.0
libtpu: 0.0.40
codegen_flags: <defaults>
</compile_context>

<pallas_src>
import random

import jax
import jax.numpy as jnp
from jax.experimental import pallas as pl
from jax.experimental.pallas import tpu as pltpu

EMBED_LEN = 32
CONV_MID = 16
KSIZE = 3
STRIDE = 2
PAD = 1
INTERVAL_CHOICES = [[0], [1], [2], [3, 4], list(range(5, 10))]
NUM_BUCKETS = len(INTERVAL_CHOICES)
OUT_PAD = 128          # lane-dense padded output width (sliced to NUM_BUCKETS)


def _round_up(x, m):
    return (x + m - 1) // m * m


# ---------------------------------------------------------------------------
# Plain-JAX glue: im2col patch extraction in (B, P, k*k*C) order.
# Feature-axis flatten order is (ky, kx, c); the synthetic conv weight below
# is generated flat in the same order.
# TODO(synk): permute real torch Conv2d weights ((c, ky, kx) flatten) here.
# ---------------------------------------------------------------------------
def im2col(x, ksize=KSIZE, stride=STRIDE, pad=PAD):
    B, C, H, W = x.shape
    Ho = (H + 2 * pad - ksize) // stride + 1
    Wo = (W + 2 * pad - ksize) // stride + 1
    xh = jnp.transpose(x, (0, 2, 3, 1))                          # NHWC (small relayout)
    xp = jnp.pad(xh, ((0, 0), (pad, pad), (pad, pad), (0, 0)))
    slabs = []
    for dy in range(ksize):
        for dx in range(ksize):
            slabs.append(xp[:, dy:dy + stride * Ho:stride,
                             dx:dx + stride * Wo:stride, :])      # (B, Ho, Wo, C)
    patches = jnp.concatenate(slabs, axis=-1)                     # (B, Ho, Wo, k*k*C)
    return patches.reshape(B, Ho * Wo, ksize * ksize * C)


# ---------------------------------------------------------------------------
# Pallas kernel: one batch block = conv-GEMM (bias folded) + ReLU + MXU sum-pool
# + fused linear tail, lane-dense padded output.
# ---------------------------------------------------------------------------
def _tdc_kernel(p_ref, w1_ref, s_ref, wcat_ref, bc_ref, out_ref):
    """p_ref : (2*Bb*P, K+1) bf16 -- frame-0 patches of the block's Bb elems,
               then frame-t patches; last column is the constant 1 (bias lane)
       w1    : (K+1, CONV_MID) bf16 conv weight with bias as its last row
       s_ref : (2*Bb, 2*Bb*P)  bf16 0/1 sum-pool selection matrix (resident)
       wcat  : (2*CONV_MID, OUT_PAD) bf16 fused tail weight (1/P folded in)
       bc    : (1, OUT_PAD) f32 fused bias
       out   : (Bb, OUT_PAD) f32"""
    bb = out_ref.shape[0]

    # conv as ONE big MXU GEMM (bias folded into the contraction), f32 acc
    h = jnp.dot(p_ref[...], w1_ref[...], preferred_element_type=jnp.float32)
    h = jnp.maximum(h, 0.0)                                       # f32 VPU (v5e-safe)

    # global average pool as an MXU matmul against the 0/1 selection matrix
    # (1/P mean scale folded into wcat, so this is a plain sum)
    pooled = jnp.dot(s_ref[...], h.astype(jnp.bfloat16),
                     preferred_element_type=jnp.float32)          # (2*Bb, 16)

    # fused tail: lane-concat (pool0 | poolt) -> single GEMM + bias
    pooled_cat = jnp.concatenate([pooled[:bb], pooled[bb:]], axis=-1)   # (Bb, 32)
    pred = jnp.dot(pooled_cat.astype(jnp.bfloat16), wcat_ref[...],
                   preferred_element_type=jnp.float32) + bc_ref[...]
    out_ref[...] = pred.astype(out_ref.dtype)


def tdc_predict(x0, xt, params, *, block_b=None):
    """x0, xt: (B, C, H, W) f32 frames -> (B, NUM_BUCKETS) f32 logits."""
    B = x0.shape[0]

    # im2col both frames in one fused pass: (2B, P, K), frame-0 rows first.
    p = im2col(jnp.concatenate([x0, xt], axis=0))
    P, K = p.shape[1], p.shape[2]
    K1 = K + 1

    if block_b is None:
        block_b = min(64, _round_up(B, 8))       # single grid step for small B
    block_b = _round_up(block_b, 8)
    b_pad = _round_up(B, block_b)
    n_blk = b_pad // block_b
    rows_blk = 2 * block_b * P

    # Build the streamed slab directly at K+1 lanes (NO 128-lane HBM padding):
    # append the constant-1 bias column, pad batch, lay rows out per block as
    # (frame, batch-in-block, patch), single bf16 cast.
    p = p.reshape(2, B, P, K)
    p = jnp.concatenate([p, jnp.ones((2, B, P, 1), p.dtype)], axis=-1)
    p = jnp.pad(p, ((0, 0), (0, b_pad - B), (0, 0), (0, 0)))
    p = p.reshape(2, n_blk, block_b, P, K1).transpose(1, 0, 2, 3, 4)
    slab = p.reshape(n_blk * rows_blk, K1).astype(jnp.bfloat16)

    # Conv weight with the bias folded in as an extra contraction row (bf16).
    w1 = jnp.concatenate([params["w_conv"], params["b_conv"]],
                         axis=0).astype(jnp.bfloat16)             # (K+1, 16)

    # 0/1 sum-pool selection matrix, VMEM-resident across grid steps.
    s_pool = jnp.kron(jnp.eye(2 * block_b, dtype=jnp.float32),
                      jnp.ones((1, P), jnp.float32)).astype(jnp.bfloat16)

    # Algebraically fused linear tail (mean-pool scale + fc + concat + head),
    # stacked into one (32, OUT_PAD) bf16 weight + f32 bias.
    wfc, bfc = params["wfc"], params["bfc"]
    wp, bp = params["wp"], params["bp"]
    w0 = (wfc @ wp[:EMBED_LEN]) / P
    wt = (wfc @ wp[EMBED_LEN:]) / P
    wcat = jnp.concatenate([w0, wt], axis=0)                      # (32, 5)
    bc = bfc @ wp[:EMBED_LEN] + bfc @ wp[EMBED_LEN:] + bp         # (1, 5)
    wcat = jnp.pad(wcat, ((0, 0), (0, OUT_PAD - NUM_BUCKETS))).astype(jnp.bfloat16)
    bc = jnp.pad(bc, ((0, 0), (0, OUT_PAD - NUM_BUCKETS))).astype(jnp.float32)

    # TODO(synk): optional v7x-only fp8(e4m3) slab to halve the DMA stream again.
    out = pl.pallas_call(
        _tdc_kernel,
        out_shape=jax.ShapeDtypeStruct((b_pad, OUT_PAD), jnp.float32),
        grid_spec=pltpu.PrefetchScalarGridSpec(
            num_scalar_prefetch=0,
            grid=(n_blk,),
            in_specs=[
                pl.BlockSpec((rows_blk, K1), lambda i: (i, 0)),            # streamed patches
                pl.BlockSpec((K1, CONV_MID), lambda i: (0, 0)),            # resident weights
                pl.BlockSpec((2 * block_b, rows_blk), lambda i: (0, 0)),   # resident pool matrix
                pl.BlockSpec((2 * CONV_MID, OUT_PAD), lambda i: (0, 0)),
                pl.BlockSpec((1, OUT_PAD), lambda i: (0, 0)),
            ],
            out_specs=pl.BlockSpec((block_b, OUT_PAD), lambda i: (i, 0)),
        ),
        compiler_params=pltpu.CompilerParams(
            # typical case is a single grid step; don't rely on megacore here
            dimension_semantics=("arbitrary",)),
    )(slab, w1, s_pool, wcat, bc)
    return out[:B, :NUM_BUCKETS]


# ---------------------------------------------------------------------------
# Parameter init (deterministic, synthetic).
# ---------------------------------------------------------------------------
def init_params(key, c_in):
    k = c_in * KSIZE * KSIZE
    ks = jax.random.split(key, 6)
    scale = 0.05
    return {
        # conv weight stored flattened as (k*k*Cin, Cout), (ky, kx, c) order
        "w_conv": scale * jax.random.normal(ks[0], (k, CONV_MID), jnp.float32),
        "b_conv": scale * jax.random.normal(ks[1], (1, CONV_MID), jnp.float32),
        "wfc": scale * jax.random.normal(ks[2], (CONV_MID, EMBED_LEN), jnp.float32),
        "bfc": scale * jax.random.normal(ks[3], (1, EMBED_LEN), jnp.float32),
        "wp": scale * jax.random.normal(ks[4], (2 * EMBED_LEN, NUM_BUCKETS), jnp.float32),
        "bp": scale * jax.random.normal(ks[5], (1, NUM_BUCKETS), jnp.float32),
    }


# ---------------------------------------------------------------------------
# TDC forward: pick_frames (host-side python randomness, as in the PyTorch
# module), encode both frames + predict temporal-distance bucket.
# ---------------------------------------------------------------------------
@jax.jit
def _tdc_apply(xs, dts, params):
    B = xs.shape[0]
    x0 = xs[:, 0]                                # (B, C, H, W)
    xt = xs[jnp.arange(B), dts]                  # (B, C, H, W)
    return tdc_predict(x0, xt, params)


def tdc_forward(xs, params, py_rng):
    B = xs.shape[0]
    interval_inds = py_rng.choices(range(NUM_BUCKETS), k=B)
    dts = [py_rng.choice(INTERVAL_CHOICES[i]) for i in interval_inds]
    pred = _tdc_apply(xs, jnp.asarray(dts, jnp.int32), params)   # (B, NUM_BUCKETS)
    true = jnp.asarray(interval_inds, dtype=jnp.int32)           # (B,)
    return pred, true


# Pure-JAX reference (unfused, f32) for correctness checking.
def _tdc_reference(p0, pt, params):
    def encode(p):
        h = jnp.maximum(jnp.einsum("bpk,kc->bpc", p, params["w_conv"]) + params["b_conv"], 0.0)
        return jnp.mean(h, axis=1) @ params["wfc"] + params["bfc"]
    fboth = jnp.concatenate([encode(p0), encode(pt)], axis=-1)
    return fboth @ params["wp"] + params["bp"]


if __name__ == "__main__":
    key = jax.random.PRNGKey(0)
    kx, kp = jax.random.split(key)

    # T >= 10 so every interval bucket (up to dt=9) is a valid frame index.
    B, T, C, H, W = 16, 10, 4, 16, 16
    xs = jax.random.normal(kx, (B, T, C, H, W), jnp.float32)
    params = init_params(kp, C)

    pred, true = tdc_forward(xs, params, random.Random(0))
    jax.block_until_ready(pred)
    jax.block_until_ready(true)

    assert pred.shape == (B, NUM_BUCKETS) and pred.dtype == jnp.float32
    assert true.shape == (B,)
    assert bool(jnp.all(jnp.isfinite(pred)))

    # Reference check: re-derive the same frame picks from the same seed.
    rng = random.Random(0)
    interval_inds = rng.choices(range(NUM_BUCKETS), k=B)
    dts = jnp.asarray([rng.choice(INTERVAL_CHOICES[i]) for i in interval_inds], jnp.int32)
    x0 = xs[:, 0]
    xt = xs[jnp.arange(B), dts]
    ref = _tdc_reference(im2col(x0), im2col(xt), params)
    assert jnp.allclose(pred, ref, rtol=5e-2, atol=5e-3)
    assert jnp.array_equal(true, jnp.asarray(interval_inds, jnp.int32))

    print("KERNEL_OK")
</pallas_src>

<mosaic_0001>
module attributes {stable_mosaic.version = 11 : i64} {
  func.func @_tdc_kernel(%arg0: i32, %arg1: memref<2048x37xbf16, #tpu.memory_space<vmem>>, %arg2: memref<37x16xbf16, #tpu.memory_space<vmem>>, %arg3: memref<32x2048xbf16, #tpu.memory_space<vmem>>, %arg4: memref<32x128xbf16, #tpu.memory_space<vmem>>, %arg5: memref<1x128xf32, #tpu.memory_space<vmem>>, %arg6: memref<16x128xf32, #tpu.memory_space<vmem>>) attributes {dimension_semantics = [#tpu.dimension_semantics<arbitrary>], iteration_bounds = array<i64: 1>, scalar_prefetch = 0 : i64, scratch_operands = 0 : i64, tpu.core_type = #tpu.core_type<tc>, window_params = [{transform_indices = @transform_0, window_bounds = array<i64: 2048, 37>}, {pipeline_mode = #tpu.pipeline_mode<synchronous>, transform_indices = @transform_1, window_bounds = array<i64: 37, 16>}, {pipeline_mode = #tpu.pipeline_mode<synchronous>, transform_indices = @transform_2, window_bounds = array<i64: 32, 2048>}, {pipeline_mode = #tpu.pipeline_mode<synchronous>, transform_indices = @transform_3, window_bounds = array<i64: 32, 128>}, {pipeline_mode = #tpu.pipeline_mode<synchronous>, transform_indices = @transform_4, window_bounds = array<i64: 1, 128>}, {transform_indices = @transform_5, window_bounds = array<i64: 16, 128>}]} {
    %c0 = arith.constant 0 : index
    %c0_0 = arith.constant 0 : index
    %0 = vector.load %arg1[%c0, %c0_0] : memref<2048x37xbf16, #tpu.memory_space<vmem>>, vector<2048x37xbf16>
    %c0_1 = arith.constant 0 : index
    %c0_2 = arith.constant 0 : index
    %1 = vector.load %arg2[%c0_1, %c0_2] : memref<37x16xbf16, #tpu.memory_space<vmem>>, vector<37x16xbf16>
    %cst = arith.constant dense<0.000000e+00> : vector<2048x16xf32>
    %2 = tpu.matmul %0, %1, %cst {dimension_numbers = #tpu.dot_dimension_numbers<[1], [0], [0], [1], [0, 0, 1, 1], [], []>} : vector<2048x37xbf16>, vector<37x16xbf16>, vector<2048x16xf32> -> vector<2048x16xf32>
    %cst_3 = arith.constant 0.000000e+00 : f32
    %3 = vector.broadcast %cst_3 : f32 to vector<2048x16xf32>
    %4 = arith.maximumf %2, %3 : vector<2048x16xf32>
    %c0_4 = arith.constant 0 : index
    %c0_5 = arith.constant 0 : index
    %5 = vector.load %arg3[%c0_4, %c0_5] : memref<32x2048xbf16, #tpu.memory_space<vmem>>, vector<32x2048xbf16>
    %6 = arith.truncf %4 : vector<2048x16xf32> to vector<2048x16xbf16>
    %cst_6 = arith.constant dense<0.000000e+00> : vector<32x16xf32>
    %7 = tpu.matmul %5, %6, %cst_6 {dimension_numbers = #tpu.dot_dimension_numbers<[1], [0], [0], [1], [0, 0, 1, 1], [], []>} : vector<32x2048xbf16>, vector<2048x16xbf16>, vector<32x16xf32> -> vector<32x16xf32>
    %8 = vector.extract_strided_slice %7 {offsets = [0, 0], sizes = [16, 16], strides = [1, 1]} : vector<32x16xf32> to vector<16x16xf32>
    %9 = vector.extract_strided_slice %7 {offsets = [16, 0], sizes = [16, 16], strides = [1, 1]} : vector<32x16xf32> to vector<16x16xf32>
    %10 = tpu.concatenate %8, %9 in 1 : vector<16x16xf32>, vector<16x16xf32> -> vector<16x32xf32>
    %11 = arith.truncf %10 : vector<16x32xf32> to vector<16x32xbf16>
    %c0_7 = arith.constant 0 : index
    %c0_8 = arith.constant 0 : index
    %12 = vector.load %arg4[%c0_7, %c0_8] : memref<32x128xbf16, #tpu.memory_space<vmem>>, vector<32x128xbf16>
    %cst_9 = arith.constant dense<0.000000e+00> : vector<16x128xf32>
    %13 = tpu.matmul %11, %12, %cst_9 {dimension_numbers = #tpu.dot_dimension_numbers<[1], [0], [0], [1], [0, 0, 1, 1], [], []>} : vector<16x32xbf16>, vector<32x128xbf16>, vector<16x128xf32> -> vector<16x128xf32>
    %c0_10 = arith.constant 0 : index
    %c0_11 = arith.constant 0 : index
    %14 = vector.load %arg5[%c0_10, %c0_11] : memref<1x128xf32, #tpu.memory_space<vmem>>, vector<1x128xf32>
    %15 = vector.broadcast %14 : vector<1x128xf32> to vector<16x128xf32>
    %16 = arith.addf %13, %15 : vector<16x128xf32>
    %c0_12 = arith.constant 0 : index
    %c0_13 = arith.constant 0 : index
    %17 = vector.load %arg6[%c0_12, %c0_13] : memref<16x128xf32, #tpu.memory_space<vmem>>, vector<16x128xf32>
    tpu.vector_store %arg6[%c0_12, %c0_13], %16 {strides = array<i32>} : memref<16x128xf32, #tpu.memory_space<vmem>>, vector<16x128xf32>,
    return
  }
  func.func @transform_0(%arg0: i32) -> (i32, i32) {
    %c0_i32 = arith.constant 0 : i32
    %c0_i32_0 = arith.constant 0 : i32
    return %arg0, %c0_i32 : i32, i32
  }
  func.func @transform_1(%arg0: i32) -> (i32, i32) {
    %c0_i32 = arith.constant 0 : i32
    %c0_i32_0 = arith.constant 0 : i32
    %c0_i32_1 = arith.constant 0 : i32
    return %c0_i32, %c0_i32_0 : i32, i32
  }
  func.func @transform_2(%arg0: i32) -> (i32, i32) {
    %c0_i32 = arith.constant 0 : i32
    %c0_i32_0 = arith.constant 0 : i32
    %c0_i32_1 = arith.constant 0 : i32
    return %c0_i32, %c0_i32_0 : i32, i32
  }
  func.func @transform_3(%arg0: i32) -> (i32, i32) {
    %c0_i32 = arith.constant 0 : i32
    %c0_i32_0 = arith.constant 0 : i32
    %c0_i32_1 = arith.constant 0 : i32
    return %c0_i32, %c0_i32_0 : i32, i32
  }
  func.func @transform_4(%arg0: i32) -> (i32, i32) {
    %c0_i32 = arith.constant 0 : i32
    %c0_i32_0 = arith.constant 0 : i32
    %c0_i32_1 = arith.constant 0 : i32
    return %c0_i32, %c0_i32_0 : i32, i32
  }
  func.func @transform_5(%arg0: i32) -> (i32, i32) {
    %c0_i32 = arith.constant 0 : i32
    %c0_i32_0 = arith.constant 0 : i32
    return %arg0, %c0_i32 : i32, i32
  }
}

</mosaic_0001>

<llo_original>
// kernel: _tdc_apply.1
$region0: #{_tdc_apply.1}
  #allocation0 [shape = 'u32[]', space=smem, size = 0x4, offset = 0x4, fixed_abs, tag = 'smem constant byte address 0x4 - core index']
  #allocation1 [shape = 'u32[72,128]{1,0:T(1,128)}', space=vmem, size = 0x9000, scoped, tag = 'internal scratch']
  %s0 = inlined_call_operand.vmem [shape: bf16[2048,37], index: 0, kind: input, shape index: {}]
  %s1 = inlined_call_operand.vmem [shape: bf16[37,16], index: 1, kind: input, shape index: {}]
  %s2 = inlined_call_operand.vmem [shape: bf16[32,2048], index: 2, kind: input, shape index: {}]
  %s3 = inlined_call_operand.vmem [shape: bf16[32,128], index: 3, kind: input, shape index: {}]
  %s4 = inlined_call_operand.vmem [shape: f32[1,128], index: 4, kind: input, shape index: {}]
  %s5 = inlined_call_operand.vmem [shape: f32[16,128], index: 5, kind: output, shape index: {}]
  %s6 = sld [smem:[#allocation0]]
  $region30: #{_tdc_apply.1} parent=0
    _
  %s8 = ssub.s32 1, %s6
  %s9 = scalar_select 0, %s8, %s6
  // Predicated region
  $region2: #{_tdc_apply.1} parent=0 // pred_check
    _
  $region3: #{_tdc_apply.1} parent=0 // pred_check_branch
    %11 = sbr.rel (0) target = $region5
  $region4: #{_tdc_apply.1} parent=0 // pred_region
    _
  $region5: #{_tdc_apply.1} parent=0 // pred_fallthru
    _
  // Predicated region
  $region6: #{_tdc_apply.1} parent=0 // pred_check
    _
  $region7: #{_tdc_apply.1} parent=0 // pred_check_branch
    %13 = sbr.rel (0) target = $region9
  $region8: #{_tdc_apply.1} parent=0 // pred_region
    _
  $region9: #{_tdc_apply.1} parent=0 // pred_fallthru
    _
  // Predicated region
  $region10: #{_tdc_apply.1} parent=0 // pred_check
    _
  $region11: #{_tdc_apply.1} parent=0 // pred_check_branch
    %15 = sbr.rel (0) target = $region13
  $region12: #{_tdc_apply.1} parent=0 // pred_region
    _
  $region13: #{_tdc_apply.1} parent=0 // pred_fallthru
    _
  // Predicated region
  $region14: #{_tdc_apply.1} parent=0 // pred_check
    _
  $region15: #{_tdc_apply.1} parent=0 // pred_check_branch
    %17 = sbr.rel (0) target = $region17
  $region16: #{_tdc_apply.1} parent=0 // pred_region
    _
  $region17: #{_tdc_apply.1} parent=0 // pred_fallthru
    _
  // Predicated region
  $region18: #{_tdc_apply.1} parent=0 // pred_check
    _
  $region19: #{_tdc_apply.1} parent=0 // pred_check_branch
    %19 = sbr.rel (0) target = $region21
  $region20: #{_tdc_apply.1} parent=0 // pred_region
    _
  $region21: #{_tdc_apply.1} parent=0 // pred_fallthru
    _
  %v21 = vld [vmem:[%s0] sm:$0xf]
  %v22 = vld [vmem:[%s0 + $0x4] sm:$0xf]
  %v23 = vld [vmem:[%s0 + $0x8] sm:$0xf]
  %v24 = vld [vmem:[%s0 + $0xc] sm:$0xf]
  %v25 = vld [vmem:[%s0 + $0x10] sm:$0xf]
  %v26 = vld [vmem:[%s0 + $0x14] sm:$0xf]
  %v27 = vld [vmem:[%s0 + $0x18] sm:$0xf]
  %v28 = vld [vmem:[%s0 + $0x1c] sm:$0xf]
  %v29 = vld [vmem:[%s0 + $0x20] sm:$0xf]
  %v30 = vld [vmem:[%s0 + $0x24] sm:$0xf]
  %v31 = vld [vmem:[%s0 + $0x28] sm:$0xf]
  %v32 = vld [vmem:[%s0 + $0x2c] sm:$0xf]
  %v33 = vld [vmem:[%s0 + $0x30] sm:$0xf]
  %v34 = vld [vmem:[%s0 + $0x34] sm:$0xf]
  %v35 = vld [vmem:[%s0 + $0x38] sm:$0xf]
  %v36 = vld [vmem:[%s0 + $0x3c] sm:$0xf]
  %v37 = vld [vmem:[%s0 + $0x40] sm:$0xf]
  %v38 = vld [vmem:[%s0 + $0x44] sm:$0xf]
  %v39 = vld [vmem:[%s0 + $0x48] sm:$0xf]
  %v40 = vld [vmem:[%s0 + $0x4c] sm:$0xf]
  %v41 = vld [vmem:[%s0 + $0x50] sm:$0xf]
  %v42 = vld [vmem:[%s0 + $0x54] sm:$0xf]
  %v43 = vld [vmem:[%s0 + $0x58] sm:$0xf]
  %v44 = vld [vmem:[%s0 + $0x5c] sm:$0xf]
  %v45 = vld [vmem:[%s0 + $0x60] sm:$0xf]
  %v46 = vld [vmem:[%s0 + $0x64] sm:$0xf]
  %v47 = vld [vmem:[%s0 + $0x68] sm:$0xf]
  %v48 = vld [vmem:[%s0 + $0x6c] sm:$0xf]
  %v49 = vld [vmem:[%s0 + $0x70] sm:$0xf]
  %v50 = vld [vmem:[%s0 + $0x74] sm:$0xf]
  %v51 = vld [vmem:[%s0 + $0x78] sm:$0xf]
  %v52 = vld [vmem:[%s0 + $0x7c] sm:$0xf]
  %v53 = vld [vmem:[%s0 + $0x80] sm:$0xf]
  %v54 = vld [vmem:[%s0 + $0x84] sm:$0xf]
  %v55 = vld [vmem:[%s0 + $0x88] sm:$0xf]
  %v56 = vld [vmem:[%s0 + $0x8c] sm:$0xf]
  %v57 = vld [vmem:[%s0 + $0x90] sm:$0xf]
  %v58 = vld [vmem:[%s0 + $0x94] sm:$0xf]
  %v59 = vld [vmem:[%s0 + $0x98] sm:$0xf]
  %v60 = vld [vmem:[%s0 + $0x9c] sm:$0xf]
  %v61 = vld [vmem:[%s0 + $0xa0] sm:$0xf]
  %v62 = vld [vmem:[%s0 + $0xa4] sm:$0xf]
  %v63 = vld [vmem:[%s0 + $0xa8] sm:$0xf]
  %v64 = vld [vmem:[%s0 + $0xac] sm:$0xf]
  %v65 = vld [vmem:[%s0 + $0xb0] sm:$0xf]
  %v66 = vld [vmem:[%s0 + $0xb4] sm:$0xf]
  %v67 = vld [vmem:[%s0 + $0xb8] sm:$0xf]
  %v68 = vld [vmem:[%s0 + $0xbc] sm:$0xf]
  %v69 = vld [vmem:[%s0 + $0xc0] sm:$0xf]
  %v70 = vld [vmem:[%s0 + $0xc4] sm:$0xf]
  %v71 = vld [vmem:[%s0 + $0xc8] sm:$0xf]
  %v72 = vld [vmem:[%s0 + $0xcc] sm:$0xf]
  %v73 = vld [vmem:[%s0 + $0xd0] sm:$0xf]
  %v74 = vld [vmem:[%s0 + $0xd4] sm:$0xf]
  %v75 = vld [vmem:[%s0 + $0xd8] sm:$0xf]
  %v76 = vld [vmem:[%s0 + $0xdc] sm:$0xf]
  %v77 = vld [vmem:[%s0 + $0xe0] sm:$0xf]
  %v78 = vld [vmem:[%s0 + $0xe4] sm:$0xf]
  %v79 = vld [vmem:[%s0 + $0xe8] sm:$0xf]
  %v80 = vld [vmem:[%s0 + $0xec] sm:$0xf]
  %v81 = vld [vmem:[%s0 + $0xf0] sm:$0xf]
  %v82 = vld [vmem:[%s0 + $0xf4] sm:$0xf]
  %v83 = vld [vmem:[%s0 + $0xf8] sm:$0xf]
  %v84 = vld [vmem:[%s0 + $0xfc] sm:$0xf]
  %v85 = vld [vmem:[%s0 + $0x100] sm:$0xf]
  %v86 = vld [vmem:[%s0 + $0x104] sm:$0xf]
  %v87 = vld [vmem:[%s0 + $0x108] sm:$0xf]
  %v88 = vld [vmem:[%s0 + $0x10c] sm:$0xf]
  %v89 = vld [vmem:[%s0 + $0x110] sm:$0xf]
  %v90 = vld [vmem:[%s0 + $0x114] sm:$0xf]
  %v91 = vld [vmem:[%s0 + $0x118] sm:$0xf]
  %v92 = vld [vmem:[%s0 + $0x11c] sm:$0xf]
  %v93 = vld [vmem:[%s0 + $0x120] sm:$0xf]
  %v94 = vld [vmem:[%s0 + $0x124] sm:$0xf]
  %v95 = vld [vmem:[%s0 + $0x128] sm:$0xf]
  %v96 = vld [vmem:[%s0 + $0x12c] sm:$0xf]
  %v97 = vld [vmem:[%s0 + $0x130] sm:$0xf]
  %v98 = vld [vmem:[%s0 + $0x134] sm:$0xf]
  %v99 = vld [vmem:[%s0 + $0x138] sm:$0xf]
  %v100 = vld [vmem:[%s0 + $0x13c] sm:$0xf]
  %v101 = vld [vmem:[%s0 + $0x140] sm:$0xf]
  %v102 = vld [vmem:[%s0 + $0x144] sm:$0xf]
  %v103 = vld [vmem:[%s0 + $0x148] sm:$0xf]
  %v104 = vld [vmem:[%s0 + $0x14c] sm:$0xf]
  %v105 = vld [vmem:[%s0 + $0x150] sm:$0xf]
  %v106 = vld [vmem:[%s0 + $0x154] sm:$0xf]
  %v107 = vld [vmem:[%s0 + $0x158] sm:$0xf]
  %v108 = vld [vmem:[%s0 + $0x15c] sm:$0xf]
  %v109 = vld [vmem:[%s0 + $0x160] sm:$0xf]
  %v110 = vld [vmem:[%s0 + $0x164] sm:$0xf]
  %v111 = vld [vmem:[%s0 + $0x168] sm:$0xf]
  %v112 = vld [vmem:[%s0 + $0x16c] sm:$0xf]
  %v113 = vld [vmem:[%s0 + $0x170] sm:$0xf]
  %v114 = vld [vmem:[%s0 + $0x174] sm:$0xf]
  %v115 = vld [vmem:[%s0 + $0x178] sm:$0xf]
  %v116 = vld [vmem:[%s0 + $0x17c] sm:$0xf]
  %v117 = vld [vmem:[%s0 + $0x180] sm:$0xf]
  %v118 = vld [vmem:[%s0 + $0x184] sm:$0xf]
  %v119 = vld [vmem:[%s0 + $0x188] sm:$0xf]
  %v120 = vld [vmem:[%s0 + $0x18c] sm:$0xf]
  %v121 = vld [vmem:[%s0 + $0x190] sm:$0xf]
  %v122 = vld [vmem:[%s0 + $0x194] sm:$0xf]
  %v123 = vld [vmem:[%s0 + $0x198] sm:$0xf]
  %v124 = vld [vmem:[%s0 + $0x19c] sm:$0xf]
  %v125 = vld [vmem:[%s0 + $0x1a0] sm:$0xf]
  %v126 = vld [vmem:[%s0 + $0x1a4] sm:$0xf]
  %v127 = vld [vmem:[%s0 + $0x1a8] sm:$0xf]
  %v128 = vld [vmem:[%s0 + $0x1ac] sm:$0xf]
  %v129 = vld [vmem:[%s0 + $0x1b0] sm:$0xf]
  %v130 = vld [vmem:[%s0 + $0x1b4] sm:$0xf]
  %v131 = vld [vmem:[%s0 + $0x1b8] sm:$0xf]
  %v132 = vld [vmem:[%s0 + $0x1bc] sm:$0xf]
  %v133 = vld [vmem:[%s0 + $0x1c0] sm:$0xf]
  %v134 = vld [vmem:[%s0 + $0x1c4] sm:$0xf]
  %v135 = vld [vmem:[%s0 + $0x1c8] sm:$0xf]
  %v136 = vld [vmem:[%s0 + $0x1cc] sm:$0xf]
  %v137 = vld [vmem:[%s0 + $0x1d0] sm:$0xf]
  %v138 = vld [vmem:[%s0 + $0x1d4] sm:$0xf]
  %v139 = vld [vmem:[%s0 + $0x1d8] sm:$0xf]
  %v140 = vld [vmem:[%s0 + $0x1dc] sm:$0xf]
  %v141 = vld [vmem:[%s0 + $0x1e0] sm:$0xf]
  %v142 = vld [vmem:[%s0 + $0x1e4] sm:$0xf]
  %v143 = vld [vmem:[%s0 + $0x1e8] sm:$0xf]
  %v144 = vld [vmem:[%s0 + $0x1ec] sm:$0xf]
  %v145 = vld [vmem:[%s0 + $0x1f0] sm:$0xf]
  %v146 = vld [vmem:[%s0 + $0x1f4] sm:$0xf]
  %v147 = vld [vmem:[%s0 + $0x1f8] sm:$0xf]
  %v148 = vld [vmem:[%s0 + $0x1fc] sm:$0xf]
  %v149 = vld [vmem:[%s0 + $0x200] sm:$0xf]
  %v150 = vld [vmem:[%s0 + $0x204] sm:$0xf]
  %v151 = vld [vmem:[%s0 + $0x208] sm:$0xf]
  %v152 = vld [vmem:[%s0 + $0x20c] sm:$0xf]
  %v153 = vld [vmem:[%s0 + $0x210] sm:$0xf]
  %v154 = vld [vmem:[%s0 + $0x214] sm:$0xf]
  %v155 = vld [vmem:[%s0 + $0x218] sm:$0xf]
  %v156 = vld [vmem:[%s0 + $0x21c] sm:$0xf]
  %v157 = vld [vmem:[%s0 + $0x220] sm:$0xf]
  %v158 = vld [vmem:[%s0 + $0x224] sm:$0xf]
  %v159 = vld [vmem:[%s0 + $0x228] sm:$0xf]
  %v160 = vld [vmem:[%s0 + $0x22c] sm:$0xf]
  %v161 = vld [vmem:[%s0 + $0x230] sm:$0xf]
  %v162 = vld [vmem:[%s0 + $0x234] sm:$0xf]
  %v163 = vld [vmem:[%s0 + $0x238] sm:$0xf]
  %v164 = vld [vmem:[%s0 + $0x23c] sm:$0xf]
  %v165 = vld [vmem:[%s0 + $0x240] sm:$0xf]
  %v166 = vld [vmem:[%s0 + $0x244] sm:$0xf]
  %v167 = vld [vmem:[%s0 + $0x248] sm:$0xf]
  %v168 = vld [vmem:[%s0 + $0x24c] sm:$0xf]
  %v169 = vld [vmem:[%s0 + $0x250] sm:$0xf]
  %v170 = vld [vmem:[%s0 + $0x254] sm:$0xf]
  %v171 = vld [vmem:[%s0 + $0x258] sm:$0xf]
  %v172 = vld [vmem:[%s0 + $0x25c] sm:$0xf]
  %v173 = vld [vmem:[%s0 + $0x260] sm:$0xf]
  %v174 = vld [vmem:[%s0 + $0x264] sm:$0xf]
  %v175 = vld [vmem:[%s0 + $0x268] sm:$0xf]
  %v176 = vld [vmem:[%s0 + $0x26c] sm:$0xf]
  %v177 = vld [vmem:[%s0 + $0x270] sm:$0xf]
  %v178 = vld [vmem:[%s0 + $0x274] sm:$0xf]
  %v179 = vld [vmem:[%s0 + $0x278] sm:$0xf]
  %v180 = vld [vmem:[%s0 + $0x27c] sm:$0xf]
  %v181 = vld [vmem:[%s0 + $0x280] sm:$0xf]
  %v182 = vld [vmem:[%s0 + $0x284] sm:$0xf]
  %v183 = vld [vmem:[%s0 + $0x288] sm:$0xf]
  %v184 = vld [vmem:[%s0 + $0x28c] sm:$0xf]
  %v185 = vld [vmem:[%s0 + $0x290] sm:$0xf]
  %v186 = vld [vmem:[%s0 + $0x294] sm:$0xf]
  %v187 = vld [vmem:[%s0 + $0x298] sm:$0xf]
  %v188 = vld [vmem:[%s0 + $0x29c] sm:$0xf]
  %v189 = vld [vmem:[%s0 + $0x2a0] sm:$0xf]
  %v190 = vld [vmem:[%s0 + $0x2a4] sm:$0xf]
  %v191 = vld [vmem:[%s0 + $0x2a8] sm:$0xf]
  %v192 = vld [vmem:[%s0 + $0x2ac] sm:$0xf]
  %v193 = vld [vmem:[%s0 + $0x2b0] sm:$0xf]
  %v194 = vld [vmem:[%s0 + $0x2b4] sm:$0xf]
  %v195 = vld [vmem:[%s0 + $0x2b8] sm:$0xf]
  %v196 = vld [vmem:[%s0 + $0x2bc] sm:$0xf]
  %v197 = vld [vmem:[%s0 + $0x2c0] sm:$0xf]
  %v198 = vld [vmem:[%s0 + $0x2c4] sm:$0xf]
  %v199 = vld [vmem:[%s0 + $0x2c8] sm:$0xf]
  %v200 = vld [vmem:[%s0 + $0x2cc] sm:$0xf]
  %v201 = vld [vmem:[%s0 + $0x2d0] sm:$0xf]
  %v202 = vld [vmem:[%s0 + $0x2d4] sm:$0xf]
  %v203 = vld [vmem:[%s0 + $0x2d8] sm:$0xf]
  %v204 = vld [vmem:[%s0 + $0x2dc] sm:$0xf]
  %v205 = vld [vmem:[%s0 + $0x2e0] sm:$0xf]
  %v206 = vld [vmem:[%s0 + $0x2e4] sm:$0xf]
  %v207 = vld [vmem:[%s0 + $0x2e8] sm:$0xf]
  %v208 = vld [vmem:[%s0 + $0x2ec] sm:$0xf]
  %v209 = vld [vmem:[%s0 + $0x2f0] sm:$0xf]
  %v210 = vld [vmem:[%s0 + $0x2f4] sm:$0xf]
  %v211 = vld [vmem:[%s0 + $0x2f8] sm:$0xf]
  %v212 = vld [vmem:[%s0 + $0x2fc] sm:$0xf]
  %v213 = vld [vmem:[%s0 + $0x300] sm:$0xf]
  %v214 = vld [vmem:[%s0 + $0x304] sm:$0xf]
  %v215 = vld [vmem:[%s0 + $0x308] sm:$0xf]
  %v216 = vld [vmem:[%s0 + $0x30c] sm:$0xf]
  %v217 = vld [vmem:[%s0 + $0x310] sm:$0xf]
  %v218 = vld [vmem:[%s0 + $0x314] sm:$0xf]
  %v219 = vld [vmem:[%s0 + $0x318] sm:$0xf]
  %v220 = vld [vmem:[%s0 + $0x31c] sm:$0xf]
  %v221 = vld [vmem:[%s0 + $0x320] sm:$0xf]
  %v222 = vld [vmem:[%s0 + $0x324] sm:$0xf]
  %v223 = vld [vmem:[%s0 + $0x328] sm:$0xf]
  %v224 = vld [vmem:[%s0 + $0x32c] sm:$0xf]
  %v225 = vld [vmem:[%s0 + $0x330] sm:$0xf]
  %v226 = vld [vmem:[%s0 + $0x334] sm:$0xf]
  %v227 = vld [vmem:[%s0 + $0x338] sm:$0xf]
  %v228 = vld [vmem:[%s0 + $0x33c] sm:$0xf]
  %v229 = vld [vmem:[%s0 + $0x340] sm:$0xf]
  %v230 = vld [vmem:[%s0 + $0x344] sm:$0xf]
  %v231 = vld [vmem:[%s0 + $0x348] sm:$0xf]
  %v232 = vld [vmem:[%s0 + $0x34c] sm:$0xf]
  %v233 = vld [vmem:[%s0 + $0x350] sm:$0xf]
  %v234 = vld [vmem:[%s0 + $0x354] sm:$0xf]
  %v235 = vld [vmem:[%s0 + $0x358] sm:$0xf]
  %v236 = vld [vmem:[%s0 + $0x35c] sm:$0xf]
  %v237 = vld [vmem:[%s0 + $0x360] sm:$0xf]
  %v238 = vld [vmem:[%s0 + $0x364] sm:$0xf]
  %v239 = vld [vmem:[%s0 + $0x368] sm:$0xf]
  %v240 = vld [vmem:[%s0 + $0x36c] sm:$0xf]
  %v241 = vld [vmem:[%s0 + $0x370] sm:$0xf]
  %v242 = vld [vmem:[%s0 + $0x374] sm:$0xf]
  %v243 = vld [vmem:[%s0 + $0x378] sm:$0xf]
  %v244 = vld [vmem:[%s0 + $0x37c] sm:$0xf]
  %v245 = vld [vmem:[%s0 + $0x380] sm:$0xf]
  %v246 = vld [vmem:[%s0 + $0x384] sm:$0xf]
  %v247 = vld [vmem:[%s0 + $0x388] sm:$0xf]
  %v248 = vld [vmem:[%s0 + $0x38c] sm:$0xf]
  %v249 = vld [vmem:[%s0 + $0x390] sm:$0xf]
  %v250 = vld [vmem:[%s0 + $0x394] sm:$0xf]
  %v251 = vld [vmem:[%s0 + $0x398] sm:$0xf]
  %v252 = vld [vmem:[%s0 + $0x39c] sm:$0xf]
  %v253 = vld [vmem:[%s0 + $0x3a0] sm:$0xf]
  %v254 = vld [vmem:[%s0 + $0x3a4] sm:$0xf]
  %v255 = vld [vmem:[%s0 + $0x3a8] sm:$0xf]
  %v256 = vld [vmem:[%s0 + $0x3ac] sm:$0xf]
  %v257 = vld [vmem:[%s0 + $0x3b0] sm:$0xf]
  %v258 = vld [vmem:[%s0 + $0x3b4] sm:$0xf]
  %v259 = vld [vmem:[%s0 + $0x3b8] sm:$0xf]
  %v260 = vld [vmem:[%s0 + $0x3bc] sm:$0xf]
  %v261 = vld [vmem:[%s0 + $0x3c0] sm:$0xf]
  %v262 = vld [vmem:[%s0 + $0x3c4] sm:$0xf]
  %v263 = vld [vmem:[%s0 + $0x3c8] sm:$0xf]
  %v264 = vld [vmem:[%s0 + $0x3cc] sm:$0xf]
  %v265 = vld [vmem:[%s0 + $0x3d0] sm:$0xf]
  %v266 = vld [vmem:[%s0 + $0x3d4] sm:$0xf]
  %v267 = vld [vmem:[%s0 + $0x3d8] sm:$0xf]
  %v268 = vld [vmem:[%s0 + $0x3dc] sm:$0xf]
  %v269 = vld [vmem:[%s0 + $0x3e0] sm:$0xf]
  %v270 = vld [vmem:[%s0 + $0x3e4] sm:$0xf]
  %v271 = vld [vmem:[%s0 + $0x3e8] sm:$0xf]
  %v272 = vld [vmem:[%s0 + $0x3ec] sm:$0xf]
  %v273 = vld [vmem:[%s0 + $0x3f0] sm:$0xf]
  %v274 = vld [vmem:[%s0 + $0x3f4] sm:$0xf]
  %v275 = vld [vmem:[%s0 + $0x3f8] sm:$0xf]
  %v276 = vld [vmem:[%s0 + $0x3fc] sm:$0xf]
  %v277 = vld [vmem:[%s1] sm:$0xf]
  %v278 = vld [vmem:[%s1 + $0x4] sm:$0xf]
  %v279 = vld [vmem:[%s1 + $0x8] sm:$0xf]
  %v280 = vld [vmem:[%s1 + $0xc] sm:$0xf]
  %v281 = vld [vmem:[%s1 + $0x10] sm:$0x7]
  %v538 = vunpack.c.l.b16 %v21
  %v539 = vunpack.c.l.b16 %v22
  %v540 = vunpack.c.l.b16 %v23
  %v541 = vunpack.c.l.b16 %v24
  %v542 = vunpack.c.l.b16 %v25
  %v543 = vunpack.c.l.b16 %v26
  %v544 = vunpack.c.l.b16 %v27
  %v545 = vunpack.c.l.b16 %v28
  %v546 = vunpack.c.l.b16 %v29
  %v547 = vunpack.c.l.b16 %v30
  %v548 = vunpack.c.l.b16 %v31
  %v549 = vunpack.c.l.b16 %v32
  %v550 = vunpack.c.l.b16 %v33
  %v551 = vunpack.c.l.b16 %v34
  %v552 = vunpack.c.l.b16 %v35
  %v553 = vunpack.c.l.b16 %v36
  %v554 = vunpack.c.l.b16 %v37
  %v555 = vunpack.c.l.b16 %v38
  %v556 = vunpack.c.l.b16 %v39
  %v557 = vunpack.c.l.b16 %v40
  %v558 = vunpack.c.l.b16 %v41
  %v559 = vunpack.c.l.b16 %v42
  %v560 = vunpack.c.l.b16 %v43
  %v561 = vunpack.c.l.b16 %v44
  %v562 = vunpack.c.l.b16 %v45
  %v563 = vunpack.c.l.b16 %v46
  %v564 = vunpack.c.l.b16 %v47
  %v565 = vunpack.c.l.b16 %v48
  %v566 = vunpack.c.l.b16 %v49
  %v567 = vunpack.c.l.b16 %v50
  %v568 = vunpack.c.l.b16 %v51
  %v569 = vunpack.c.l.b16 %v52
  %v570 = vunpack.c.l.b16 %v53
  %v571 = vunpack.c.l.b16 %v54
  %v572 = vunpack.c.l.b16 %v55
  %v573 = vunpack.c.l.b16 %v56
  %v574 = vunpack.c.l.b16 %v57
  %v575 = vunpack.c.l.b16 %v58
  %v576 = vunpack.c.l.b16 %v59
  %v577 = vunpack.c.l.b16 %v60
  %v578 = vunpack.c.l.b16 %v61
  %v579 = vunpack.c.l.b16 %v62
  %v580 = vunpack.c.l.b16 %v63
  %v581 = vunpack.c.l.b16 %v64
  %v582 = vunpack.c.l.b16 %v65
  %v583 = vunpack.c.l.b16 %v66
  %v584 = vunpack.c.l.b16 %v67
  %v585 = vunpack.c.l.b16 %v68
  %v586 = vunpack.c.l.b16 %v69
  %v587 = vunpack.c.l.b16 %v70
  %v588 = vunpack.c.l.b16 %v71
  %v589 = vunpack.c.l.b16 %v72
  %v590 = vunpack.c.l.b16 %v73
  %v591 = vunpack.c.l.b16 %v74
  %v592 = vunpack.c.l.b16 %v75
  %v593 = vunpack.c.l.b16 %v76
  %v594 = vunpack.c.l.b16 %v77
  %v595 = vunpack.c.l.b16 %v78
  %v596 = vunpack.c.l.b16 %v79
  %v597 = vunpack.c.l.b16 %v80
  %v598 = vunpack.c.l.b16 %v81
  %v599 = vunpack.c.l.b16 %v82
  %v600 = vunpack.c.l.b16 %v83
  %v601 = vunpack.c.l.b16 %v84
  %v602 = vunpack.c.l.b16 %v85
  %v603 = vunpack.c.l.b16 %v86
  %v604 = vunpack.c.l.b16 %v87
  %v605 = vunpack.c.l.b16 %v88
  %v606 = vunpack.c.l.b16 %v89
  %v607 = vunpack.c.l.b16 %v90
  %v608 = vunpack.c.l.b16 %v91
  %v609 = vunpack.c.l.b16 %v92
  %v610 = vunpack.c.l.b16 %v93
  %v611 = vunpack.c.l.b16 %v94
  %v612 = vunpack.c.l.b16 %v95
  %v613 = vunpack.c.l.b16 %v96
  %v614 = vunpack.c.l.b16 %v97
  %v615 = vunpack.c.l.b16 %v98
  %v616 = vunpack.c.l.b16 %v99
  %v617 = vunpack.c.l.b16 %v100
  %v618 = vunpack.c.l.b16 %v101
  %v619 = vunpack.c.l.b16 %v102
  %v620 = vunpack.c.l.b16 %v103
  %v621 = vunpack.c.l.b16 %v104
  %v622 = vunpack.c.l.b16 %v105
  %v623 = vunpack.c.l.b16 %v106
  %v624 = vunpack.c.l.b16 %v107
  %v625 = vunpack.c.l.b16 %v108
  %v626 = vunpack.c.l.b16 %v109
  %v627 = vunpack.c.l.b16 %v110
  %v628 = vunpack.c.l.b16 %v111
  %v629 = vunpack.c.l.b16 %v112
  %v630 = vunpack.c.l.b16 %v113
  %v631 = vunpack.c.l.b16 %v114
  %v632 = vunpack.c.l.b16 %v115
  %v633 = vunpack.c.l.b16 %v116
  %v634 = vunpack.c.l.b16 %v117
  %v635 = vunpack.c.l.b16 %v118
  %v636 = vunpack.c.l.b16 %v119
  %v637 = vunpack.c.l.b16 %v120
  %v638 = vunpack.c.l.b16 %v121
  %v639 = vunpack.c.l.b16 %v122
  %v640 = vunpack.c.l.b16 %v123
  %v641 = vunpack.c.l.b16 %v124
  %v642 = vunpack.c.l.b16 %v125
  %v643 = vunpack.c.l.b16 %v126
  %v644 = vunpack.c.l.b16 %v127
  %v645 = vunpack.c.l.b16 %v128
  %v646 = vunpack.c.l.b16 %v129
  %v647 = vunpack.c.l.b16 %v130
  %v648 = vunpack.c.l.b16 %v131
  %v649 = vunpack.c.l.b16 %v132
  %v650 = vunpack.c.l.b16 %v133
  %v651 = vunpack.c.l.b16 %v134
  %v652 = vunpack.c.l.b16 %v135
  %v653 = vunpack.c.l.b16 %v136
  %v654 = vunpack.c.l.b16 %v137
  %v655 = vunpack.c.l.b16 %v138
  %v656 = vunpack.c.l.b16 %v139
  %v657 = vunpack.c.l.b16 %v140
  %v658 = vunpack.c.l.b16 %v141
  %v659 = vunpack.c.l.b16 %v142
  %v660 = vunpack.c.l.b16 %v143
  %v661 = vunpack.c.l.b16 %v144
  %v662 = vunpack.c.l.b16 %v145
  %v663 = vunpack.c.l.b16 %v146
  %v664 = vunpack.c.l.b16 %v147
  %v665 = vunpack.c.l.b16 %v148
  %v666 = vunpack.c.l.b16 %v149
  %v667 = vunpack.c.l.b16 %v150
  %v668 = vunpack.c.l.b16 %v151
  %v669 = vunpack.c.l.b16 %v152
  %v670 = vunpack.c.l.b16 %v153
  %v671 = vunpack.c.l.b16 %v154
  %v672 = vunpack.c.l.b16 %v155
  %v673 = vunpack.c.l.b16 %v156
  %v674 = vunpack.c.l.b16 %v157
  %v675 = vunpack.c.l.b16 %v158
  %v676 = vunpack.c.l.b16 %v159
  %v677 = vunpack.c.l.b16 %v160
  %v678 = vunpack.c.l.b16 %v161
  %v679 = vunpack.c.l.b16 %v162
  %v680 = vunpack.c.l.b16 %v163
  %v681 = vunpack.c.l.b16 %v164
  %v682 = vunpack.c.l.b16 %v165
  %v683 = vunpack.c.l.b16 %v166
  %v684 = vunpack.c.l.b16 %v167
  %v685 = vunpack.c.l.b16 %v168
  %v686 = vunpack.c.l.b16 %v169
  %v687 = vunpack.c.l.b16 %v170
  %v688 = vunpack.c.l.b16 %v171
  %v689 = vunpack.c.l.b16 %v172
  %v690 = vunpack.c.l.b16 %v173
  %v691 = vunpack.c.l.b16 %v174
  %v692 = vunpack.c.l.b16 %v175
  %v693 = vunpack.c.l.b16 %v176
  %v694 = vunpack.c.l.b16 %v177
  %v695 = vunpack.c.l.b16 %v178
  %v696 = vunpack.c.l.b16 %v179
  %v697 = vunpack.c.l.b16 %v180
  %v698 = vunpack.c.l.b16 %v181
  %v699 = vunpack.c.l.b16 %v182
  %v700 = vunpack.c.l.b16 %v183
  %v701 = vunpack.c.l.b16 %v184
  %v702 = vunpack.c.l.b16 %v185
  %v703 = vunpack.c.l.b16 %v186
  %v704 = vunpack.c.l.b16 %v187
  %v705 = vunpack.c.l.b16 %v188
  %v706 = vunpack.c.l.b16 %v189
  %v707 = vunpack.c.l.b16 %v190
  %v708 = vunpack.c.l.b16 %v191
  %v709 = vunpack.c.l.b16 %v192
  %v710 = vunpack.c.l.b16 %v193
  %v711 = vunpack.c.l.b16 %v194
  %v712 = vunpack.c.l.b16 %v195
  %v713 = vunpack.c.l.b16 %v196
  %v714 = vunpack.c.l.b16 %v197
  %v715 = vunpack.c.l.b16 %v198
  %v716 = vunpack.c.l.b16 %v199
  %v717 = vunpack.c.l.b16 %v200
  %v718 = vunpack.c.l.b16 %v201
  %v719 = vunpack.c.l.b16 %v202
  %v720 = vunpack.c.l.b16 %v203
  %v721 = vunpack.c.l.b16 %v204
  %v722 = vunpack.c.l.b16 %v205
  %v723 = vunpack.c.l.b16 %v206
  %v724 = vunpack.c.l.b16 %v207
  %v725 = vunpack.c.l.b16 %v208
  %v726 = vunpack.c.l.b16 %v209
  %v727 = vunpack.c.l.b16 %v210
  %v728 = vunpack.c.l.b16 %v211
  %v729 = vunpack.c.l.b16 %v212
  %v730 = vunpack.c.l.b16 %v213
  %v731 = vunpack.c.l.b16 %v214
  %v732 = vunpack.c.l.b16 %v215
  %v733 = vunpack.c.l.b16 %v216
  %v734 = vunpack.c.l.b16 %v217
  %v735 = vunpack.c.l.b16 %v218
  %v736 = vunpack.c.l.b16 %v219
  %v737 = vunpack.c.l.b16 %v220
  %v738 = vunpack.c.l.b16 %v221
  %v739 = vunpack.c.l.b16 %v222
  %v740 = vunpack.c.l.b16 %v223
  %v741 = vunpack.c.l.b16 %v224
  %v742 = vunpack.c.l.b16 %v225
  %v743 = vunpack.c.l.b16 %v226
  %v744 = vunpack.c.l.b16 %v227
  %v745 = vunpack.c.l.b16 %v228
  %v746 = vunpack.c.l.b16 %v229
  %v747 = vunpack.c.l.b16 %v230
  %v748 = vunpack.c.l.b16 %v231
  %v749 = vunpack.c.l.b16 %v232
  %v750 = vunpack.c.l.b16 %v233
  %v751 = vunpack.c.l.b16 %v234
  %v752 = vunpack.c.l.b16 %v235
  %v753 = vunpack.c.l.b16 %v236
  %v754 = vunpack.c.l.b16 %v237
  %v755 = vunpack.c.l.b16 %v238
  %v756 = vunpack.c.l.b16 %v239
  %v757 = vunpack.c.l.b16 %v240
  %v758 = vunpack.c.l.b16 %v241
  %v759 = vunpack.c.l.b16 %v242
  %v760 = vunpack.c.l.b16 %v243
  %v761 = vunpack.c.l.b16 %v244
  %v762 = vunpack.c.l.b16 %v245
  %v763 = vunpack.c.l.b16 %v246
  %v764 = vunpack.c.l.b16 %v247
  %v765 = vunpack.c.l.b16 %v248
  %v766 = vunpack.c.l.b16 %v249
  %v767 = vunpack.c.l.b16 %v250
  %v768 = vunpack.c.l.b16 %v251
  %v769 = vunpack.c.l.b16 %v252
  %v770 = vunpack.c.l.b16 %v253
  %v771 = vunpack.c.l.b16 %v254
  %v772 = vunpack.c.l.b16 %v255
  %v773 = vunpack.c.l.b16 %v256
  %v774 = vunpack.c.l.b16 %v257
  %v775 = vunpack.c.l.b16 %v258
  %v776 = vunpack.c.l.b16 %v259
  %v777 = vunpack.c.l.b16 %v260
  %v778 = vunpack.c.l.b16 %v261
  %v779 = vunpack.c.l.b16 %v262
  %v780 = vunpack.c.l.b16 %v263
  %v781 = vunpack.c.l.b16 %v264
  %v782 = vunpack.c.l.b16 %v265
  %v783 = vunpack.c.l.b16 %v266
  %v784 = vunpack.c.l.b16 %v267
  %v785 = vunpack.c.l.b16 %v268
  %v786 = vunpack.c.l.b16 %v269
  %v787 = vunpack.c.l.b16 %v270
  %v788 = vunpack.c.l.b16 %v271
  %v789 = vunpack.c.l.b16 %v272
  %v790 = vunpack.c.l.b16 %v273
  %v791 = vunpack.c.l.b16 %v274
  %v792 = vunpack.c.l.b16 %v275
  %v793 = vunpack.c.l.b16 %v276
  %v794 = vpack.c.b16 %v539, %v538
  %v795 = vpack.c.b16 %v541, %v540
  %v796 = vpack.c.b16 %v543, %v542
  %v797 = vpack.c.b16 %v545, %v544
  %v798 = vpack.c.b16 %v547, %v546
  %v799 = vpack.c.b16 %v549, %v548
  %v800 = vpack.c.b16 %v551, %v550
  %v801 = vpack.c.b16 %v553, %v552
  %v802 = vpack.c.b16 %v555, %v554
  %v803 = vpack.c.b16 %v557, %v556
  %v804 = vpack.c.b16 %v559, %v558
  %v805 = vpack.c.b16 %v561, %v560
  %v806 = vpack.c.b16 %v563, %v562
  %v807 = vpack.c.b16 %v565, %v564
  %v808 = vpack.c.b16 %v567, %v566
  %v809 = vpack.c.b16 %v569, %v568
  %v810 = vpack.c.b16 %v571, %v570
  %v811 = vpack.c.b16 %v573, %v572
  %v812 = vpack.c.b16 %v575, %v574
  %v813 = vpack.c.b16 %v577, %v576
  %v814 = vpack.c.b16 %v579, %v578
  %v815 = vpack.c.b16 %v581, %v580
  %v816 = vpack.c.b16 %v583, %v582
  %v817 = vpack.c.b16 %v585, %v584
  %v818 = vpack.c.b16 %v587, %v586
  %v819 = vpack.c.b16 %v589, %v588
  %v820 = vpack.c.b16 %v591, %v590
  %v821 = vpack.c.b16 %v593, %v592
  %v822 = vpack.c.b16 %v595, %v594
  %v823 = vpack.c.b16 %v597, %v596
  %v824 = vpack.c.b16 %v599, %v598
  %v825 = vpack.c.b16 %v601, %v600
  %v826 = vpack.c.b16 %v603, %v602
  %v827 = vpack.c.b16 %v605, %v604
  %v828 = vpack.c.b16 %v607, %v606
  %v829 = vpack.c.b16 %v609, %v608
  %v830 = vpack.c.b16 %v611, %v610
  %v831 = vpack.c.b16 %v613, %v612
  %v832 = vpack.c.b16 %v615, %v614
  %v833 = vpack.c.b16 %v617, %v616
  %v834 = vpack.c.b16 %v619, %v618
  %v835 = vpack.c.b16 %v621, %v620
  %v836 = vpack.c.b16 %v623, %v622
  %v837 = vpack.c.b16 %v625, %v624
  %v838 = vpack.c.b16 %v627, %v626
  %v839 = vpack.c.b16 %v629, %v628
  %v840 = vpack.c.b16 %v631, %v630
  %v841 = vpack.c.b16 %v633, %v632
  %v842 = vpack.c.b16 %v635, %v634
  %v843 = vpack.c.b16 %v637, %v636
  %v844 = vpack.c.b16 %v639, %v638
  %v845 = vpack.c.b16 %v641, %v640
  %v846 = vpack.c.b16 %v643, %v642
  %v847 = vpack.c.b16 %v645, %v644
  %v848 = vpack.c.b16 %v647, %v646
  %v849 = vpack.c.b16 %v649, %v648
  %v850 = vpack.c.b16 %v651, %v650
  %v851 = vpack.c.b16 %v653, %v652
  %v852 = vpack.c.b16 %v655, %v654
  %v853 = vpack.c.b16 %v657, %v656
  %v854 = vpack.c.b16 %v659, %v658
  %v855 = vpack.c.b16 %v661, %v660
  %v856 = vpack.c.b16 %v663, %v662
  %v857 = vpack.c.b16 %v665, %v664
  %v858 = vpack.c.b16 %v667, %v666
  %v859 = vpack.c.b16 %v669, %v668
  %v860 = vpack.c.b16 %v671, %v670
  %v861 = vpack.c.b16 %v673, %v672
  %v862 = vpack.c.b16 %v675, %v674
  %v863 = vpack.c.b16 %v677, %v676
  %v864 = vpack.c.b16 %v679, %v678
  %v865 = vpack.c.b16 %v681, %v680
  %v866 = vpack.c.b16 %v683, %v682
  %v867 = vpack.c.b16 %v685, %v684
  %v868 = vpack.c.b16 %v687, %v686
  %v869 = vpack.c.b16 %v689, %v688
  %v870 = vpack.c.b16 %v691, %v690
  %v871 = vpack.c.b16 %v693, %v692
  %v872 = vpack.c.b16 %v695, %v694
  %v873 = vpack.c.b16 %v697, %v696
  %v874 = vpack.c.b16 %v699, %v698
  %v875 = vpack.c.b16 %v701, %v700
  %v876 = vpack.c.b16 %v703, %v702
  %v877 = vpack.c.b16 %v705, %v704
  %v878 = vpack.c.b16 %v707, %v706
  %v879 = vpack.c.b16 %v709, %v708
  %v880 = vpack.c.b16 %v711, %v710
  %v881 = vpack.c.b16 %v713, %v712
  %v882 = vpack.c.b16 %v715, %v714
  %v883 = vpack.c.b16 %v717, %v716
  %v884 = vpack.c.b16 %v719, %v718
  %v885 = vpack.c.b16 %v721, %v720
  %v886 = vpack.c.b16 %v723, %v722
  %v887 = vpack.c.b16 %v725, %v724
  %v888 = vpack.c.b16 %v727, %v726
  %v889 = vpack.c.b16 %v729, %v728
  %v890 = vpack.c.b16 %v731, %v730
  %v891 = vpack.c.b16 %v733, %v732
  %v892 = vpack.c.b16 %v735, %v734
  %v893 = vpack.c.b16 %v737, %v736
  %v894 = vpack.c.b16 %v739, %v738
  %v895 = vpack.c.b16 %v741, %v740
  %v896 = vpack.c.b16 %v743, %v742
  %v897 = vpack.c.b16 %v745, %v744
  %v898 = vpack.c.b16 %v747, %v746
  %v899 = vpack.c.b16 %v749, %v748
  %v900 = vpack.c.b16 %v751, %v750
  %v901 = vpack.c.b16 %v753, %v752
  %v902 = vpack.c.b16 %v755, %v754
  %v903 = vpack.c.b16 %v757, %v756
  %v904 = vpack.c.b16 %v759, %v758
  %v905 = vpack.c.b16 %v761, %v760
  %v906 = vpack.c.b16 %v763, %v762
  %v907 = vpack.c.b16 %v765, %v764
  %v908 = vpack.c.b16 %v767, %v766
  %v909 = vpack.c.b16 %v769, %v768
  %v910 = vpack.c.b16 %v771, %v770
  %v911 = vpack.c.b16 %v773, %v772
  %v912 = vpack.c.b16 %v775, %v774
  %v913 = vpack.c.b16 %v777, %v776
  %v914 = vpack.c.b16 %v779, %v778
  %v915 = vpack.c.b16 %v781, %v780
  %v916 = vpack.c.b16 %v783, %v782
  %v917 = vpack.c.b16 %v785, %v784
  %v918 = vpack.c.b16 %v787, %v786
  %v919 = vpack.c.b16 %v789, %v788
  %v920 = vpack.c.b16 %v791, %v790
  %v921 = vpack.c.b16 %v793, %v792
  %v927 = vunpack.c.l.b16 %v277
  %v928 = vunpack.c.l.b16 %v278
  %v929 = vunpack.c.l.b16 %v279
  %v930 = vunpack.c.l.b16 %v280
  %v931 = vunpack.c.l.b16 %v281
  %v932 = vpack.c.b16 %v928, %v927
  %v933 = vpack.c.b16 %v930, %v929
  %v934 = vpack.c.b16 %v931, %v931
  %vm937 = vcmask 302080
  %v939 = vsel %vm937, %v794, 0
  %v942 = vsel %vm937, %v795, 0
  %v945 = vsel %vm937, %v796, 0
  %v948 = vsel %vm937, %v797, 0
  %v951 = vsel %vm937, %v798, 0
  %v954 = vsel %vm937, %v799, 0
  %v957 = vsel %vm937, %v800, 0
  %v960 = vsel %vm937, %v801, 0
  %v963 = vsel %vm937, %v802, 0
  %v966 = vsel %vm937, %v803, 0
  %v969 = vsel %vm937, %v804, 0
  %v972 = vsel %vm937, %v805, 0
  %v975 = vsel %vm937, %v806, 0
  %v978 = vsel %vm937, %v807, 0
  %v981 = vsel %vm937, %v808, 0
  %v984 = vsel %vm937, %v809, 0
  %v987 = vsel %vm937, %v810, 0
  %v990 = vsel %vm937, %v811, 0
  %v993 = vsel %vm937, %v812, 0
  %v996 = vsel %vm937, %v813, 0
  %v999 = vsel %vm937, %v814, 0
  %v1002 = vsel %vm937, %v815, 0
  %v1005 = vsel %vm937, %v816, 0
  %v1008 = vsel %vm937, %v817, 0
  %v1011 = vsel %vm937, %v818, 0
  %v1014 = vsel %vm937, %v819, 0
  %v1017 = vsel %vm937, %v820, 0
  %v1020 = vsel %vm937, %v821, 0
  %v1023 = vsel %vm937, %v822, 0
  %v1026 = vsel %vm937, %v823, 0
  %v1029 = vsel %vm937, %v824, 0
  %v1032 = vsel %vm937, %v825, 0
  %v1035 = vsel %vm937, %v826, 0
  %v1038 = vsel %vm937, %v827, 0
  %v1041 = vsel %vm937, %v828, 0
  %v1044 = vsel %vm937, %v829, 0
  %v1047 = vsel %vm937, %v830, 0
  %v1050 = vsel %vm937, %v831, 0
  %v1053 = vsel %vm937, %v832, 0
  %v1056 = vsel %vm937, %v833, 0
  %v1059 = vsel %vm937, %v834, 0
  %v1062 = vsel %vm937, %v835, 0
  %v1065 = vsel %vm937, %v836, 0
  %v1068 = vsel %vm937, %v837, 0
  %v1071 = vsel %vm937, %v838, 0
  %v1074 = vsel %vm937, %v839, 0
  %v1077 = vsel %vm937, %v840, 0
  %v1080 = vsel %vm937, %v841, 0
  %v1083 = vsel %vm937, %v842, 0
  %v1086 = vsel %vm937, %v843, 0
  %v1089 = vsel %vm937, %v844, 0
  %v1092 = vsel %vm937, %v845, 0
  %v1095 = vsel %vm937, %v846, 0
  %v1098 = vsel %vm937, %v847, 0
  %v1101 = vsel %vm937, %v848, 0
  %v1104 = vsel %vm937, %v849, 0
  %v1107 = vsel %vm937, %v850, 0
  %v1110 = vsel %vm937, %v851, 0
  %v1113 = vsel %vm937, %v852, 0
  %v1116 = vsel %vm937, %v853, 0
  %v1119 = vsel %vm937, %v854, 0
  %v1122 = vsel %vm937, %v855, 0
  %v1125 = vsel %vm937, %v856, 0
  %v1128 = vsel %vm937, %v857, 0
  %v1131 = vsel %vm937, %v858, 0
  %v1134 = vsel %vm937, %v859, 0
  %v1137 = vsel %vm937, %v860, 0
  %v1140 = vsel %vm937, %v861, 0
  %v1143 = vsel %vm937, %v862, 0
  %v1146 = vsel %vm937, %v863, 0
  %v1149 = vsel %vm937, %v864, 0
  %v1152 = vsel %vm937, %v865, 0
  %v1155 = vsel %vm937, %v866, 0
  %v1158 = vsel %vm937, %v867, 0
  %v1161 = vsel %vm937, %v868, 0
  %v1164 = vsel %vm937, %v869, 0
  %v1167 = vsel %vm937, %v870, 0
  %v1170 = vsel %vm937, %v871, 0
  %v1173 = vsel %vm937, %v872, 0
  %v1176 = vsel %vm937, %v873, 0
  %v1179 = vsel %vm937, %v874, 0
  %v1182 = vsel %vm937, %v875, 0
  %v1185 = vsel %vm937, %v876, 0
  %v1188 = vsel %vm937, %v877, 0
  %v1191 = vsel %vm937, %v878, 0
  %v1194 = vsel %vm937, %v879, 0
  %v1197 = vsel %vm937, %v880, 0
  %v1200 = vsel %vm937, %v881, 0
  %v1203 = vsel %vm937, %v882, 0
  %v1206 = vsel %vm937, %v883, 0
  %v1209 = vsel %vm937, %v884, 0
  %v1212 = vsel %vm937, %v885, 0
  %v1215 = vsel %vm937, %v886, 0
  %v1218 = vsel %vm937, %v887, 0
  %v1221 = vsel %vm937, %v888, 0
  %v1224 = vsel %vm937, %v889, 0
  %v1227 = vsel %vm937, %v890, 0
  %v1230 = vsel %vm937, %v891, 0
  %v1233 = vsel %vm937, %v892, 0
  %v1236 = vsel %vm937, %v893, 0
  %v1239 = vsel %vm937, %v894, 0
  %v1242 = vsel %vm937, %v895, 0
  %v1245 = vsel %vm937, %v896, 0
  %v1248 = vsel %vm937, %v897, 0
  %v1251 = vsel %vm937, %v898, 0
  %v1254 = vsel %vm937, %v899, 0
  %v1257 = vsel %vm937, %v900, 0
  %v1260 = vsel %vm937, %v901, 0
  %v1263 = vsel %vm937, %v902, 0
  %v1266 = vsel %vm937, %v903, 0
  %v1269 = vsel %vm937, %v904, 0
  %v1272 = vsel %vm937, %v905, 0
  %v1275 = vsel %vm937, %v906, 0
  %v1278 = vsel %vm937, %v907, 0
  %v1281 = vsel %vm937, %v908, 0
  %v1284 = vsel %vm937, %v909, 0
  %v1287 = vsel %vm937, %v910, 0
  %v1290 = vsel %vm937, %v911, 0
  %v1293 = vsel %vm937, %v912, 0
  %v1296 = vsel %vm937, %v913, 0
  %v1299 = vsel %vm937, %v914, 0
  %v1302 = vsel %vm937, %v915, 0
  %v1305 = vsel %vm937, %v916, 0
  %v1308 = vsel %vm937, %v917, 0
  %v1311 = vsel %vm937, %v918, 0
  %v1314 = vsel %vm937, %v919, 0
  %v1317 = vsel %vm937, %v920, 0
  %v1320 = vsel %vm937, %v921, 0
  %vm1322 = vcmask 1041408
  %vm1323 = vcmask 1042432
  %v1324 = vsel %vm1322, 4294967295, 65535
  %v1325 = vsel %vm1323, %v1324, 0
  %v1327 = vand.u32 %v934, %v1325
  %1329 = vmatpush.bf16.msra.mxu0 0
  %1330 = vmatpush.bf16.msra.mxu0 0
  %1331 = vmatpush.bf16.msra.mxu0 0
  %1332 = vmatpush.bf16.msra.mxu0 0
  %1333 = vmatpush.bf16.msra.mxu0 0
  %1334 = vmatpush.bf16.msra.mxu0 %v1327
  %1335 = vmatpush.bf16.msra.mxu0 %v933
  %1336 = vmatpush.bf16.msra.mxu0 %v932
  %1337 = vmatmul.bf16.gmra.mxu0 %v939
  %v1338 = vpop.f32.mrf.mxu0
  %v1339 = vadd.f32 0.0, %v1338
  %v1340 = vpop.f32.mrf.mxu0
  %v1341 = vadd.f32 0.0, %v1340
  %1342 = vmatmul.bf16.gmra.mxu0 %v942
  %v1343 = vpop.f32.mrf.mxu0
  %v1344 = vadd.f32 0.0, %v1343
  %v1345 = vpop.f32.mrf.mxu0
  %v1346 = vadd.f32 0.0, %v1345
  %1347 = vmatmul.bf16.gmra.mxu0 %v945
  %v1348 = vpop.f32.mrf.mxu0
  %v1349 = vadd.f32 0.0, %v1348
  %v1350 = vpop.f32.mrf.mxu0
  %v1351 = vadd.f32 0.0, %v1350
  %1352 = vmatmul.bf16.gmra.mxu0 %v948
  %v1353 = vpop.f32.mrf.mxu0
  %v1354 = vadd.f32 0.0, %v1353
  %v1355 = vpop.f32.mrf.mxu0
  %v1356 = vadd.f32 0.0, %v1355
  %1357 = vmatmul.bf16.gmra.mxu0 %v951
  %v1358 = vpop.f32.mrf.mxu0
  %v1359 = vadd.f32 0.0, %v1358
  %v1360 = vpop.f32.mrf.mxu0
  %v1361 = vadd.f32 0.0, %v1360
  %1362 = vmatmul.bf16.gmra.mxu0 %v954
  %v1363 = vpop.f32.mrf.mxu0
  %v1364 = vadd.f32 0.0, %v1363
  %v1365 = vpop.f32.mrf.mxu0
  %v1366 = vadd.f32 0.0, %v1365
  %1367 = vmatmul.bf16.gmra.mxu0 %v957
  %v1368 = vpop.f32.mrf.mxu0
  %v1369 = vadd.f32 0.0, %v1368
  %v1370 = vpop.f32.mrf.mxu0
  %v1371 = vadd.f32 0.0, %v1370
  %1372 = vmatmul.bf16.gmra.mxu0 %v960
  %v1373 = vpop.f32.mrf.mxu0
  %v1374 = vadd.f32 0.0, %v1373
  %v1375 = vpop.f32.mrf.mxu0
  %v1376 = vadd.f32 0.0, %v1375
  %1377 = vmatmul.bf16.gmra.mxu0 %v963
  %v1378 = vpop.f32.mrf.mxu0
  %v1379 = vadd.f32 0.0, %v1378
  %v1380 = vpop.f32.mrf.mxu0
  %v1381 = vadd.f32 0.0, %v1380
  %1382 = vmatmul.bf16.gmra.mxu0 %v966
  %v1383 = vpop.f32.mrf.mxu0
  %v1384 = vadd.f32 0.0, %v1383
  %v1385 = vpop.f32.mrf.mxu0
  %v1386 = vadd.f32 0.0, %v1385
  %1387 = vmatmul.bf16.gmra.mxu0 %v969
  %v1388 = vpop.f32.mrf.mxu0
  %v1389 = vadd.f32 0.0, %v1388
  %v1390 = vpop.f32.mrf.mxu0
  %v1391 = vadd.f32 0.0, %v1390
  %1392 = vmatmul.bf16.gmra.mxu0 %v972
  %v1393 = vpop.f32.mrf.mxu0
  %v1394 = vadd.f32 0.0, %v1393
  %v1395 = vpop.f32.mrf.mxu0
  %v1396 = vadd.f32 0.0, %v1395
  %1397 = vmatmul.bf16.gmra.mxu0 %v975
  %v1398 = vpop.f32.mrf.mxu0
  %v1399 = vadd.f32 0.0, %v1398
  %v1400 = vpop.f32.mrf.mxu0
  %v1401 = vadd.f32 0.0, %v1400
  %1402 = vmatmul.bf16.gmra.mxu0 %v978
  %v1403 = vpop.f32.mrf.mxu0
  %v1404 = vadd.f32 0.0, %v1403
  %v1405 = vpop.f32.mrf.mxu0
  %v1406 = vadd.f32 0.0, %v1405
  %1407 = vmatmul.bf16.gmra.mxu0 %v981
  %v1408 = vpop.f32.mrf.mxu0
  %v1409 = vadd.f32 0.0, %v1408
  %v1410 = vpop.f32.mrf.mxu0
  %v1411 = vadd.f32 0.0, %v1410
  %1412 = vmatmul.bf16.gmra.mxu0 %v984
  %v1413 = vpop.f32.mrf.mxu0
  %v1414 = vadd.f32 0.0, %v1413
  %v1415 = vpop.f32.mrf.mxu0
  %v1416 = vadd.f32 0.0, %v1415
  %1417 = vmatmul.bf16.gmra.mxu0 %v987
  %v1418 = vpop.f32.mrf.mxu0
  %v1419 = vadd.f32 0.0, %v1418
  %v1420 = vpop.f32.mrf.mxu0
  %v1421 = vadd.f32 0.0, %v1420
  %1422 = vmatmul.bf16.gmra.mxu0 %v990
  %v1423 = vpop.f32.mrf.mxu0
  %v1424 = vadd.f32 0.0, %v1423
  %v1425 = vpop.f32.mrf.mxu0
  %v1426 = vadd.f32 0.0, %v1425
  %1427 = vmatmul.bf16.gmra.mxu0 %v993
  %v1428 = vpop.f32.mrf.mxu0
  %v1429 = vadd.f32 0.0, %v1428
  %v1430 = vpop.f32.mrf.mxu0
  %v1431 = vadd.f32 0.0, %v1430
  %1432 = vmatmul.bf16.gmra.mxu0 %v996
  %v1433 = vpop.f32.mrf.mxu0
  %v1434 = vadd.f32 0.0, %v1433
  %v1435 = vpop.f32.mrf.mxu0
  %v1436 = vadd.f32 0.0, %v1435
  %1437 = vmatmul.bf16.gmra.mxu0 %v999
  %v1438 = vpop.f32.mrf.mxu0
  %v1439 = vadd.f32 0.0, %v1438
  %v1440 = vpop.f32.mrf.mxu0
  %v1441 = vadd.f32 0.0, %v1440
  %1442 = vmatmul.bf16.gmra.mxu0 %v1002
  %v1443 = vpop.f32.mrf.mxu0
  %v1444 = vadd.f32 0.0, %v1443
  %v1445 = vpop.f32.mrf.mxu0
  %v1446 = vadd.f32 0.0, %v1445
  %1447 = vmatmul.bf16.gmra.mxu0 %v1005
  %v1448 = vpop.f32.mrf.mxu0
  %v1449 = vadd.f32 0.0, %v1448
  %v1450 = vpop.f32.mrf.mxu0
  %v1451 = vadd.f32 0.0, %v1450
  %1452 = vmatmul.bf16.gmra.mxu0 %v1008
  %v1453 = vpop.f32.mrf.mxu0
  %v1454 = vadd.f32 0.0, %v1453
  %v1455 = vpop.f32.mrf.mxu0
  %v1456 = vadd.f32 0.0, %v1455
  %1457 = vmatmul.bf16.gmra.mxu0 %v1011
  %v1458 = vpop.f32.mrf.mxu0
  %v1459 = vadd.f32 0.0, %v1458
  %v1460 = vpop.f32.mrf.mxu0
  %v1461 = vadd.f32 0.0, %v1460
  %1462 = vmatmul.bf16.gmra.mxu0 %v1014
  %v1463 = vpop.f32.mrf.mxu0
  %v1464 = vadd.f32 0.0, %v1463
  %v1465 = vpop.f32.mrf.mxu0
  %v1466 = vadd.f32 0.0, %v1465
  %1467 = vmatmul.bf16.gmra.mxu0 %v1017
  %v1468 = vpop.f32.mrf.mxu0
  %v1469 = vadd.f32 0.0, %v1468
  %v1470 = vpop.f32.mrf.mxu0
  %v1471 = vadd.f32 0.0, %v1470
  %1472 = vmatmul.bf16.gmra.mxu0 %v1020
  %v1473 = vpop.f32.mrf.mxu0
  %v1474 = vadd.f32 0.0, %v1473
  %v1475 = vpop.f32.mrf.mxu0
  %v1476 = vadd.f32 0.0, %v1475
  %1477 = vmatmul.bf16.gmra.mxu0 %v1023
  %v1478 = vpop.f32.mrf.mxu0
  %v1479 = vadd.f32 0.0, %v1478
  %v1480 = vpop.f32.mrf.mxu0
  %v1481 = vadd.f32 0.0, %v1480
  %1482 = vmatmul.bf16.gmra.mxu0 %v1026
  %v1483 = vpop.f32.mrf.mxu0
  %v1484 = vadd.f32 0.0, %v1483
  %v1485 = vpop.f32.mrf.mxu0
  %v1486 = vadd.f32 0.0, %v1485
  %1487 = vmatmul.bf16.gmra.mxu0 %v1029
  %v1488 = vpop.f32.mrf.mxu0
  %v1489 = vadd.f32 0.0, %v1488
  %v1490 = vpop.f32.mrf.mxu0
  %v1491 = vadd.f32 0.0, %v1490
  %1492 = vmatmul.bf16.gmra.mxu0 %v1032
  %v1493 = vpop.f32.mrf.mxu0
  %v1494 = vadd.f32 0.0, %v1493
  %v1495 = vpop.f32.mrf.mxu0
  %v1496 = vadd.f32 0.0, %v1495
  %1497 = vmatmul.bf16.gmra.mxu0 %v1035
  %v1498 = vpop.f32.mrf.mxu0
  %v1499 = vadd.f32 0.0, %v1498
  %v1500 = vpop.f32.mrf.mxu0
  %v1501 = vadd.f32 0.0, %v1500
  %1502 = vmatmul.bf16.gmra.mxu0 %v1038
  %v1503 = vpop.f32.mrf.mxu0
  %v1504 = vadd.f32 0.0, %v1503
  %v1505 = vpop.f32.mrf.mxu0
  %v1506 = vadd.f32 0.0, %v1505
  %1507 = vmatmul.bf16.gmra.mxu0 %v1041
  %v1508 = vpop.f32.mrf.mxu0
  %v1509 = vadd.f32 0.0, %v1508
  %v1510 = vpop.f32.mrf.mxu0
  %v1511 = vadd.f32 0.0, %v1510
  %1512 = vmatmul.bf16.gmra.mxu0 %v1044
  %v1513 = vpop.f32.mrf.mxu0
  %v1514 = vadd.f32 0.0, %v1513
  %v1515 = vpop.f32.mrf.mxu0
  %v1516 = vadd.f32 0.0, %v1515
  %1517 = vmatmul.bf16.gmra.mxu0 %v1047
  %v1518 = vpop.f32.mrf.mxu0
  %v1519 = vadd.f32 0.0, %v1518
  %v1520 = vpop.f32.mrf.mxu0
  %v1521 = vadd.f32 0.0, %v1520
  %1522 = vmatmul.bf16.gmra.mxu0 %v1050
  %v1523 = vpop.f32.mrf.mxu0
  %v1524 = vadd.f32 0.0, %v1523
  %v1525 = vpop.f32.mrf.mxu0
  %v1526 = vadd.f32 0.0, %v1525
  %1527 = vmatmul.bf16.gmra.mxu0 %v1053
  %v1528 = vpop.f32.mrf.mxu0
  %v1529 = vadd.f32 0.0, %v1528
  %v1530 = vpop.f32.mrf.mxu0
  %v1531 = vadd.f32 0.0, %v1530
  %1532 = vmatmul.bf16.gmra.mxu0 %v1056
  %v1533 = vpop.f32.mrf.mxu0
  %v1534 = vadd.f32 0.0, %v1533
  %v1535 = vpop.f32.mrf.mxu0
  %v1536 = vadd.f32 0.0, %v1535
  %1537 = vmatmul.bf16.gmra.mxu0 %v1059
  %v1538 = vpop.f32.mrf.mxu0
  %v1539 = vadd.f32 0.0, %v1538
  %v1540 = vpop.f32.mrf.mxu0
  %v1541 = vadd.f32 0.0, %v1540
  %1542 = vmatmul.bf16.gmra.mxu0 %v1062
  %v1543 = vpop.f32.mrf.mxu0
  %v1544 = vadd.f32 0.0, %v1543
  %v1545 = vpop.f32.mrf.mxu0
  %v1546 = vadd.f32 0.0, %v1545
  %1547 = vmatmul.bf16.gmra.mxu0 %v1065
  %v1548 = vpop.f32.mrf.mxu0
  %v1549 = vadd.f32 0.0, %v1548
  %v1550 = vpop.f32.mrf.mxu0
  %v1551 = vadd.f32 0.0, %v1550
  %1552 = vmatmul.bf16.gmra.mxu0 %v1068
  %v1553 = vpop.f32.mrf.mxu0
  %v1554 = vadd.f32 0.0, %v1553
  %v1555 = vpop.f32.mrf.mxu0
  %v1556 = vadd.f32 0.0, %v1555
  %1557 = vmatmul.bf16.gmra.mxu0 %v1071
  %v1558 = vpop.f32.mrf.mxu0
  %v1559 = vadd.f32 0.0, %v1558
  %v1560 = vpop.f32.mrf.mxu0
  %v1561 = vadd.f32 0.0, %v1560
  %1562 = vmatmul.bf16.gmra.mxu0 %v1074
  %v1563 = vpop.f32.mrf.mxu0
  %v1564 = vadd.f32 0.0, %v1563
  %v1565 = vpop.f32.mrf.mxu0
  %v1566 = vadd.f32 0.0, %v1565
  %1567 = vmatmul.bf16.gmra.mxu0 %v1077
  %v1568 = vpop.f32.mrf.mxu0
  %v1569 = vadd.f32 0.0, %v1568
  %v1570 = vpop.f32.mrf.mxu0
  %v1571 = vadd.f32 0.0, %v1570
  %1572 = vmatmul.bf16.gmra.mxu0 %v1080
  %v1573 = vpop.f32.mrf.mxu0
  %v1574 = vadd.f32 0.0, %v1573
  %v1575 = vpop.f32.mrf.mxu0
  %v1576 = vadd.f32 0.0, %v1575
  %1577 = vmatmul.bf16.gmra.mxu0 %v1083
  %v1578 = vpop.f32.mrf.mxu0
  %v1579 = vadd.f32 0.0, %v1578
  %v1580 = vpop.f32.mrf.mxu0
  %v1581 = vadd.f32 0.0, %v1580
  %1582 = vmatmul.bf16.gmra.mxu0 %v1086
  %v1583 = vpop.f32.mrf.mxu0
  %v1584 = vadd.f32 0.0, %v1583
  %v1585 = vpop.f32.mrf.mxu0
  %v1586 = vadd.f32 0.0, %v1585
  %1587 = vmatmul.bf16.gmra.mxu0 %v1089
  %v1588 = vpop.f32.mrf.mxu0
  %v1589 = vadd.f32 0.0, %v1588
  %v1590 = vpop.f32.mrf.mxu0
  %v1591 = vadd.f32 0.0, %v1590
  %1592 = vmatmul.bf16.gmra.mxu0 %v1092
  %v1593 = vpop.f32.mrf.mxu0
  %v1594 = vadd.f32 0.0, %v1593
  %v1595 = vpop.f32.mrf.mxu0
  %v1596 = vadd.f32 0.0, %v1595
  %1597 = vmatmul.bf16.gmra.mxu0 %v1095
  %v1598 = vpop.f32.mrf.mxu0
  %v1599 = vadd.f32 0.0, %v1598
  %v1600 = vpop.f32.mrf.mxu0
  %v1601 = vadd.f32 0.0, %v1600
  %1602 = vmatmul.bf16.gmra.mxu0 %v1098
  %v1603 = vpop.f32.mrf.mxu0
  %v1604 = vadd.f32 0.0, %v1603
  %v1605 = vpop.f32.mrf.mxu0
  %v1606 = vadd.f32 0.0, %v1605
  %1607 = vmatmul.bf16.gmra.mxu0 %v1101
  %v1608 = vpop.f32.mrf.mxu0
  %v1609 = vadd.f32 0.0, %v1608
  %v1610 = vpop.f32.mrf.mxu0
  %v1611 = vadd.f32 0.0, %v1610
  %1612 = vmatmul.bf16.gmra.mxu0 %v1104
  %v1613 = vpop.f32.mrf.mxu0
  %v1614 = vadd.f32 0.0, %v1613
  %v1615 = vpop.f32.mrf.mxu0
  %v1616 = vadd.f32 0.0, %v1615
  %1617 = vmatmul.bf16.gmra.mxu0 %v1107
  %v1618 = vpop.f32.mrf.mxu0
  %v1619 = vadd.f32 0.0, %v1618
  %v1620 = vpop.f32.mrf.mxu0
  %v1621 = vadd.f32 0.0, %v1620
  %1622 = vmatmul.bf16.gmra.mxu0 %v1110
  %v1623 = vpop.f32.mrf.mxu0
  %v1624 = vadd.f32 0.0, %v1623
  %v1625 = vpop.f32.mrf.mxu0
  %v1626 = vadd.f32 0.0, %v1625
  %1627 = vmatmul.bf16.gmra.mxu0 %v1113
  %v1628 = vpop.f32.mrf.mxu0
  %v1629 = vadd.f32 0.0, %v1628
  %v1630 = vpop.f32.mrf.mxu0
  %v1631 = vadd.f32 0.0, %v1630
  %1632 = vmatmul.bf16.gmra.mxu0 %v1116
  %v1633 = vpop.f32.mrf.mxu0
  %v1634 = vadd.f32 0.0, %v1633
  %v1635 = vpop.f32.mrf.mxu0
  %v1636 = vadd.f32 0.0, %v1635
  %1637 = vmatmul.bf16.gmra.mxu0 %v1119
  %v1638 = vpop.f32.mrf.mxu0
  %v1639 = vadd.f32 0.0, %v1638
  %v1640 = vpop.f32.mrf.mxu0
  %v1641 = vadd.f32 0.0, %v1640
  %1642 = vmatmul.bf16.gmra.mxu0 %v1122
  %v1643 = vpop.f32.mrf.mxu0
  %v1644 = vadd.f32 0.0, %v1643
  %v1645 = vpop.f32.mrf.mxu0
  %v1646 = vadd.f32 0.0, %v1645
  %1647 = vmatmul.bf16.gmra.mxu0 %v1125
  %v1648 = vpop.f32.mrf.mxu0
  %v1649 = vadd.f32 0.0, %v1648
  %v1650 = vpop.f32.mrf.mxu0
  %v1651 = vadd.f32 0.0, %v1650
  %1652 = vmatmul.bf16.gmra.mxu0 %v1128
  %v1653 = vpop.f32.mrf.mxu0
  %v1654 = vadd.f32 0.0, %v1653
  %v1655 = vpop.f32.mrf.mxu0
  %v1656 = vadd.f32 0.0, %v1655
  %1657 = vmatmul.bf16.gmra.mxu0 %v1131
  %v1658 = vpop.f32.mrf.mxu0
  %v1659 = vadd.f32 0.0, %v1658
  %v1660 = vpop.f32.mrf.mxu0
  %v1661 = vadd.f32 0.0, %v1660
  %1662 = vmatmul.bf16.gmra.mxu0 %v1134
  %v1663 = vpop.f32.mrf.mxu0
  %v1664 = vadd.f32 0.0, %v1663
  %v1665 = vpop.f32.mrf.mxu0
  %v1666 = vadd.f32 0.0, %v1665
  %1667 = vmatmul.bf16.gmra.mxu0 %v1137
  %v1668 = vpop.f32.mrf.mxu0
  %v1669 = vadd.f32 0.0, %v1668
  %v1670 = vpop.f32.mrf.mxu0
  %v1671 = vadd.f32 0.0, %v1670
  %1672 = vmatmul.bf16.gmra.mxu0 %v1140
  %v1673 = vpop.f32.mrf.mxu0
  %v1674 = vadd.f32 0.0, %v1673
  %v1675 = vpop.f32.mrf.mxu0
  %v1676 = vadd.f32 0.0, %v1675
  %1677 = vmatmul.bf16.gmra.mxu0 %v1143
  %v1678 = vpop.f32.mrf.mxu0
  %v1679 = vadd.f32 0.0, %v1678
  %v1680 = vpop.f32.mrf.mxu0
  %v1681 = vadd.f32 0.0, %v1680
  %1682 = vmatmul.bf16.gmra.mxu0 %v1146
  %v1683 = vpop.f32.mrf.mxu0
  %v1684 = vadd.f32 0.0, %v1683
  %v1685 = vpop.f32.mrf.mxu0
  %v1686 = vadd.f32 0.0, %v1685
  %1687 = vmatmul.bf16.gmra.mxu0 %v1149
  %v1688 = vpop.f32.mrf.mxu0
  %v1689 = vadd.f32 0.0, %v1688
  %v1690 = vpop.f32.mrf.mxu0
  %v1691 = vadd.f32 0.0, %v1690
  %1692 = vmatmul.bf16.gmra.mxu0 %v1152
  %v1693 = vpop.f32.mrf.mxu0
  %v1694 = vadd.f32 0.0, %v1693
  %v1695 = vpop.f32.mrf.mxu0
  %v1696 = vadd.f32 0.0, %v1695
  %1697 = vmatmul.bf16.gmra.mxu0 %v1155
  %v1698 = vpop.f32.mrf.mxu0
  %v1699 = vadd.f32 0.0, %v1698
  %v1700 = vpop.f32.mrf.mxu0
  %v1701 = vadd.f32 0.0, %v1700
  %1702 = vmatmul.bf16.gmra.mxu0 %v1158
  %v1703 = vpop.f32.mrf.mxu0
  %v1704 = vadd.f32 0.0, %v1703
  %v1705 = vpop.f32.mrf.mxu0
  %v1706 = vadd.f32 0.0, %v1705
  %1707 = vmatmul.bf16.gmra.mxu0 %v1161
  %v1708 = vpop.f32.mrf.mxu0
  %v1709 = vadd.f32 0.0, %v1708
  %v1710 = vpop.f32.mrf.mxu0
  %v1711 = vadd.f32 0.0, %v1710
  %1712 = vmatmul.bf16.gmra.mxu0 %v1164
  %v1713 = vpop.f32.mrf.mxu0
  %v1714 = vadd.f32 0.0, %v1713
  %v1715 = vpop.f32.mrf.mxu0
  %v1716 = vadd.f32 0.0, %v1715
  %1717 = vmatmul.bf16.gmra.mxu0 %v1167
  %v1718 = vpop.f32.mrf.mxu0
  %v1719 = vadd.f32 0.0, %v1718
  %v1720 = vpop.f32.mrf.mxu0
  %v1721 = vadd.f32 0.0, %v1720
  %1722 = vmatmul.bf16.gmra.mxu0 %v1170
  %v1723 = vpop.f32.mrf.mxu0
  %v1724 = vadd.f32 0.0, %v1723
  %v1725 = vpop.f32.mrf.mxu0
  %v1726 = vadd.f32 0.0, %v1725
  %1727 = vmatmul.bf16.gmra.mxu0 %v1173
  %v1728 = vpop.f32.mrf.mxu0
  %v1729 = vadd.f32 0.0, %v1728
  %v1730 = vpop.f32.mrf.mxu0
  %v1731 = vadd.f32 0.0, %v1730
  %1732 = vmatmul.bf16.gmra.mxu0 %v1176
  %v1733 = vpop.f32.mrf.mxu0
  %v1734 = vadd.f32 0.0, %v1733
  %v1735 = vpop.f32.mrf.mxu0
  %v1736 = vadd.f32 0.0, %v1735
  %1737 = vmatmul.bf16.gmra.mxu0 %v1179
  %v1738 = vpop.f32.mrf.mxu0
  %v1739 = vadd.f32 0.0, %v1738
  %v1740 = vpop.f32.mrf.mxu0
  %v1741 = vadd.f32 0.0, %v1740
  %1742 = vmatmul.bf16.gmra.mxu0 %v1182
  %v1743 = vpop.f32.mrf.mxu0
  %v1744 = vadd.f32 0.0, %v1743
  %v1745 = vpop.f32.mrf.mxu0
  %v1746 = vadd.f32 0.0, %v1745
  %1747 = vmatmul.bf16.gmra.mxu0 %v1185
  %v1748 = vpop.f32.mrf.mxu0
  %v1749 = vadd.f32 0.0, %v1748
  %v1750 = vpop.f32.mrf.mxu0
  %v1751 = vadd.f32 0.0, %v1750
  %1752 = vmatmul.bf16.gmra.mxu0 %v1188
  %v1753 = vpop.f32.mrf.mxu0
  %v1754 = vadd.f32 0.0, %v1753
  %v1755 = vpop.f32.mrf.mxu0
  %v1756 = vadd.f32 0.0, %v1755
  %1757 = vmatmul.bf16.gmra.mxu0 %v1191
  %v1758 = vpop.f32.mrf.mxu0
  %v1759 = vadd.f32 0.0, %v1758
  %v1760 = vpop.f32.mrf.mxu0
  %v1761 = vadd.f32 0.0, %v1760
  %1762 = vmatmul.bf16.gmra.mxu0 %v1194
  %v1763 = vpop.f32.mrf.mxu0
  %v1764 = vadd.f32 0.0, %v1763
  %v1765 = vpop.f32.mrf.mxu0
  %v1766 = vadd.f32 0.0, %v1765
  %1767 = vmatmul.bf16.gmra.mxu0 %v1197
  %v1768 = vpop.f32.mrf.mxu0
  %v1769 = vadd.f32 0.0, %v1768
  %v1770 = vpop.f32.mrf.mxu0
  %v1771 = vadd.f32 0.0, %v1770
  %1772 = vmatmul.bf16.gmra.mxu0 %v1200
  %v1773 = vpop.f32.mrf.mxu0
  %v1774 = vadd.f32 0.0, %v1773
  %v1775 = vpop.f32.mrf.mxu0
  %v1776 = vadd.f32 0.0, %v1775
  %1777 = vmatmul.bf16.gmra.mxu0 %v1203
  %v1778 = vpop.f32.mrf.mxu0
  %v1779 = vadd.f32 0.0, %v1778
  %v1780 = vpop.f32.mrf.mxu0
  %v1781 = vadd.f32 0.0, %v1780
  %1782 = vmatmul.bf16.gmra.mxu0 %v1206
  %v1783 = vpop.f32.mrf.mxu0
  %v1784 = vadd.f32 0.0, %v1783
  %v1785 = vpop.f32.mrf.mxu0
  %v1786 = vadd.f32 0.0, %v1785
  %1787 = vmatmul.bf16.gmra.mxu0 %v1209
  %v1788 = vpop.f32.mrf.mxu0
  %v1789 = vadd.f32 0.0, %v1788
  %v1790 = vpop.f32.mrf.mxu0
  %v1791 = vadd.f32 0.0, %v1790
  %1792 = vmatmul.bf16.gmra.mxu0 %v1212
  %v1793 = vpop.f32.mrf.mxu0
  %v1794 = vadd.f32 0.0, %v1793
  %v1795 = vpop.f32.mrf.mxu0
  %v1796 = vadd.f32 0.0, %v1795
  %1797 = vmatmul.bf16.gmra.mxu0 %v1215
  %v1798 = vpop.f32.mrf.mxu0
  %v1799 = vadd.f32 0.0, %v1798
  %v1800 = vpop.f32.mrf.mxu0
  %v1801 = vadd.f32 0.0, %v1800
  %1802 = vmatmul.bf16.gmra.mxu0 %v1218
  %v1803 = vpop.f32.mrf.mxu0
  %v1804 = vadd.f32 0.0, %v1803
  %v1805 = vpop.f32.mrf.mxu0
  %v1806 = vadd.f32 0.0, %v1805
  %1807 = vmatmul.bf16.gmra.mxu0 %v1221
  %v1808 = vpop.f32.mrf.mxu0
  %v1809 = vadd.f32 0.0, %v1808
  %v1810 = vpop.f32.mrf.mxu0
  %v1811 = vadd.f32 0.0, %v1810
  %1812 = vmatmul.bf16.gmra.mxu0 %v1224
  %v1813 = vpop.f32.mrf.mxu0
  %v1814 = vadd.f32 0.0, %v1813
  %v1815 = vpop.f32.mrf.mxu0
  %v1816 = vadd.f32 0.0, %v1815
  %1817 = vmatmul.bf16.gmra.mxu0 %v1227
  %v1818 = vpop.f32.mrf.mxu0
  %v1819 = vadd.f32 0.0, %v1818
  %v1820 = vpop.f32.mrf.mxu0
  %v1821 = vadd.f32 0.0, %v1820
  %1822 = vmatmul.bf16.gmra.mxu0 %v1230
  %v1823 = vpop.f32.mrf.mxu0
  %v1824 = vadd.f32 0.0, %v1823
  %v1825 = vpop.f32.mrf.mxu0
  %v1826 = vadd.f32 0.0, %v1825
  %1827 = vmatmul.bf16.gmra.mxu0 %v1233
  %v1828 = vpop.f32.mrf.mxu0
  %v1829 = vadd.f32 0.0, %v1828
  %v1830 = vpop.f32.mrf.mxu0
  %v1831 = vadd.f32 0.0, %v1830
  %1832 = vmatmul.bf16.gmra.mxu0 %v1236
  %v1833 = vpop.f32.mrf.mxu0
  %v1834 = vadd.f32 0.0, %v1833
  %v1835 = vpop.f32.mrf.mxu0
  %v1836 = vadd.f32 0.0, %v1835
  %1837 = vmatmul.bf16.gmra.mxu0 %v1239
  %v1838 = vpop.f32.mrf.mxu0
  %v1839 = vadd.f32 0.0, %v1838
  %v1840 = vpop.f32.mrf.mxu0
  %v1841 = vadd.f32 0.0, %v1840
  %1842 = vmatmul.bf16.gmra.mxu0 %v1242
  %v1843 = vpop.f32.mrf.mxu0
  %v1844 = vadd.f32 0.0, %v1843
  %v1845 = vpop.f32.mrf.mxu0
  %v1846 = vadd.f32 0.0, %v1845
  %1847 = vmatmul.bf16.gmra.mxu0 %v1245
  %v1848 = vpop.f32.mrf.mxu0
  %v1849 = vadd.f32 0.0, %v1848
  %v1850 = vpop.f32.mrf.mxu0
  %v1851 = vadd.f32 0.0, %v1850
  %1852 = vmatmul.bf16.gmra.mxu0 %v1248
  %v1853 = vpop.f32.mrf.mxu0
  %v1854 = vadd.f32 0.0, %v1853
  %v1855 = vpop.f32.mrf.mxu0
  %v1856 = vadd.f32 0.0, %v1855
  %1857 = vmatmul.bf16.gmra.mxu0 %v1251
  %v1858 = vpop.f32.mrf.mxu0
  %v1859 = vadd.f32 0.0, %v1858
  %v1860 = vpop.f32.mrf.mxu0
  %v1861 = vadd.f32 0.0, %v1860
  %1862 = vmatmul.bf16.gmra.mxu0 %v1254
  %v1863 = vpop.f32.mrf.mxu0
  %v1864 = vadd.f32 0.0, %v1863
  %v1865 = vpop.f32.mrf.mxu0
  %v1866 = vadd.f32 0.0, %v1865
  %1867 = vmatmul.bf16.gmra.mxu0 %v1257
  %v1868 = vpop.f32.mrf.mxu0
  %v1869 = vadd.f32 0.0, %v1868
  %v1870 = vpop.f32.mrf.mxu0
  %v1871 = vadd.f32 0.0, %v1870
  %1872 = vmatmul.bf16.gmra.mxu0 %v1260
  %v1873 = vpop.f32.mrf.mxu0
  %v1874 = vadd.f32 0.0, %v1873
  %v1875 = vpop.f32.mrf.mxu0
  %v1876 = vadd.f32 0.0, %v1875
  %1877 = vmatmul.bf16.gmra.mxu0 %v1263
  %v1878 = vpop.f32.mrf.mxu0
  %v1879 = vadd.f32 0.0, %v1878
  %v1880 = vpop.f32.mrf.mxu0
  %v1881 = vadd.f32 0.0, %v1880
  %1882 = vmatmul.bf16.gmra.mxu0 %v1266
  %v1883 = vpop.f32.mrf.mxu0
  %v1884 = vadd.f32 0.0, %v1883
  %v1885 = vpop.f32.mrf.mxu0
  %v1886 = vadd.f32 0.0, %v1885
  %1887 = vmatmul.bf16.gmra.mxu0 %v1269
  %v1888 = vpop.f32.mrf.mxu0
  %v1889 = vadd.f32 0.0, %v1888
  %v1890 = vpop.f32.mrf.mxu0
  %v1891 = vadd.f32 0.0, %v1890
  %1892 = vmatmul.bf16.gmra.mxu0 %v1272
  %v1893 = vpop.f32.mrf.mxu0
  %v1894 = vadd.f32 0.0, %v1893
  %v1895 = vpop.f32.mrf.mxu0
  %v1896 = vadd.f32 0.0, %v1895
  %1897 = vmatmul.bf16.gmra.mxu0 %v1275
  %v1898 = vpop.f32.mrf.mxu0
  %v1899 = vadd.f32 0.0, %v1898
  %v1900 = vpop.f32.mrf.mxu0
  %v1901 = vadd.f32 0.0, %v1900
  %1902 = vmatmul.bf16.gmra.mxu0 %v1278
  %v1903 = vpop.f32.mrf.mxu0
  %v1904 = vadd.f32 0.0, %v1903
  %v1905 = vpop.f32.mrf.mxu0
  %v1906 = vadd.f32 0.0, %v1905
  %1907 = vmatmul.bf16.gmra.mxu0 %v1281
  %v1908 = vpop.f32.mrf.mxu0
  %v1909 = vadd.f32 0.0, %v1908
  %v1910 = vpop.f32.mrf.mxu0
  %v1911 = vadd.f32 0.0, %v1910
  %1912 = vmatmul.bf16.gmra.mxu0 %v1284
  %v1913 = vpop.f32.mrf.mxu0
  %v1914 = vadd.f32 0.0, %v1913
  %v1915 = vpop.f32.mrf.mxu0
  %v1916 = vadd.f32 0.0, %v1915
  %1917 = vmatmul.bf16.gmra.mxu0 %v1287
  %v1918 = vpop.f32.mrf.mxu0
  %v1919 = vadd.f32 0.0, %v1918
  %v1920 = vpop.f32.mrf.mxu0
  %v1921 = vadd.f32 0.0, %v1920
  %1922 = vmatmul.bf16.gmra.mxu0 %v1290
  %v1923 = vpop.f32.mrf.mxu0
  %v1924 = vadd.f32 0.0, %v1923
  %v1925 = vpop.f32.mrf.mxu0
  %v1926 = vadd.f32 0.0, %v1925
  %1927 = vmatmul.bf16.gmra.mxu0 %v1293
  %v1928 = vpop.f32.mrf.mxu0
  %v1929 = vadd.f32 0.0, %v1928
  %v1930 = vpop.f32.mrf.mxu0
  %v1931 = vadd.f32 0.0, %v1930
  %1932 = vmatmul.bf16.gmra.mxu0 %v1296
  %v1933 = vpop.f32.mrf.mxu0
  %v1934 = vadd.f32 0.0, %v1933
  %v1935 = vpop.f32.mrf.mxu0
  %v1936 = vadd.f32 0.0, %v1935
  %1937 = vmatmul.bf16.gmra.mxu0 %v1299
  %v1938 = vpop.f32.mrf.mxu0
  %v1939 = vadd.f32 0.0, %v1938
  %v1940 = vpop.f32.mrf.mxu0
  %v1941 = vadd.f32 0.0, %v1940
  %1942 = vmatmul.bf16.gmra.mxu0 %v1302
  %v1943 = vpop.f32.mrf.mxu0
  %v1944 = vadd.f32 0.0, %v1943
  %v1945 = vpop.f32.mrf.mxu0
  %v1946 = vadd.f32 0.0, %v1945
  %1947 = vmatmul.bf16.gmra.mxu0 %v1305
  %v1948 = vpop.f32.mrf.mxu0
  %v1949 = vadd.f32 0.0, %v1948
  %v1950 = vpop.f32.mrf.mxu0
  %v1951 = vadd.f32 0.0, %v1950
  %1952 = vmatmul.bf16.gmra.mxu0 %v1308
  %v1953 = vpop.f32.mrf.mxu0
  %v1954 = vadd.f32 0.0, %v1953
  %v1955 = vpop.f32.mrf.mxu0
  %v1956 = vadd.f32 0.0, %v1955
  %1957 = vmatmul.bf16.gmra.mxu0 %v1311
  %v1958 = vpop.f32.mrf.mxu0
  %v1959 = vadd.f32 0.0, %v1958
  %v1960 = vpop.f32.mrf.mxu0
  %v1961 = vadd.f32 0.0, %v1960
  %1962 = vmatmul.bf16.gmra.mxu0 %v1314
  %v1963 = vpop.f32.mrf.mxu0
  %v1964 = vadd.f32 0.0, %v1963
  %v1965 = vpop.f32.mrf.mxu0
  %v1966 = vadd.f32 0.0, %v1965
  %1967 = vmatmul.bf16.gmra.mxu0 %v1317
  %v1968 = vpop.f32.mrf.mxu0
  %v1969 = vadd.f32 0.0, %v1968
  %v1970 = vpop.f32.mrf.mxu0
  %v1971 = vadd.f32 0.0, %v1970
  %1972 = vmatmul.bf16.gmra.mxu0 %v1320
  %v1973 = vpop.f32.mrf.mxu0
  %v1974 = vadd.f32 0.0, %v1973
  %v1975 = vpop.f32.mrf.mxu0
  %v1976 = vadd.f32 0.0, %v1975
  %1977 = vdwg.mxu0
  %v1978 = vmax.f32 %v1339, 0.0
  %v1979 = vmax.f32 %v1341, 0.0
  %v1980 = vmax.f32 %v1344, 0.0
  %v1981 = vmax.f32 %v1346, 0.0
  %v1982 = vmax.f32 %v1349, 0.0
  %v1983 = vmax.f32 %v1351, 0.0
  %v1984 = vmax.f32 %v1354, 0.0
  %v1985 = vmax.f32 %v1356, 0.0
  %v1986 = vmax.f32 %v1359, 0.0
  %v1987 = vmax.f32 %v1361, 0.0
  %v1988 = vmax.f32 %v1364, 0.0
  %v1989 = vmax.f32 %v1366, 0.0
  %v1990 = vmax.f32 %v1369, 0.0
  %v1991 = vmax.f32 %v1371, 0.0
  %v1992 = vmax.f32 %v1374, 0.0
  %v1993 = vmax.f32 %v1376, 0.0
  %v1994 = vmax.f32 %v1379, 0.0
  %v1995 = vmax.f32 %v1381, 0.0
  %v1996 = vmax.f32 %v1384, 0.0
  %v1997 = vmax.f32 %v1386, 0.0
  %v1998 = vmax.f32 %v1389, 0.0
  %v1999 = vmax.f32 %v1391, 0.0
  %v2000 = vmax.f32 %v1394, 0.0
  %v2001 = vmax.f32 %v1396, 0.0
  %v2002 = vmax.f32 %v1399, 0.0
  %v2003 = vmax.f32 %v1401, 0.0
  %v2004 = vmax.f32 %v1404, 0.0
  %v2005 = vmax.f32 %v1406, 0.0
  %v2006 = vmax.f32 %v1409, 0.0
  %v2007 = vmax.f32 %v1411, 0.0
  %v2008 = vmax.f32 %v1414, 0.0
  %v2009 = vmax.f32 %v1416, 0.0
  %v2010 = vmax.f32 %v1419, 0.0
  %v2011 = vmax.f32 %v1421, 0.0
  %v2012 = vmax.f32 %v1424, 0.0
  %v2013 = vmax.f32 %v1426, 0.0
  %v2014 = vmax.f32 %v1429, 0.0
  %v2015 = vmax.f32 %v1431, 0.0
  %v2016 = vmax.f32 %v1434, 0.0
  %v2017 = vmax.f32 %v1436, 0.0
  %v2018 = vmax.f32 %v1439, 0.0
  %v2019 = vmax.f32 %v1441, 0.0
  %v2020 = vmax.f32 %v1444, 0.0
  %v2021 = vmax.f32 %v1446, 0.0
  %v2022 = vmax.f32 %v1449, 0.0
  %v2023 = vmax.f32 %v1451, 0.0
  %v2024 = vmax.f32 %v1454, 0.0
  %v2025 = vmax.f32 %v1456, 0.0
  %v2026 = vmax.f32 %v1459, 0.0
  %v2027 = vmax.f32 %v1461, 0.0
  %v2028 = vmax.f32 %v1464, 0.0
  %v2029 = vmax.f32 %v1466, 0.0
  %v2030 = vmax.f32 %v1469, 0.0
  %v2031 = vmax.f32 %v1471, 0.0
  %v2032 = vmax.f32 %v1474, 0.0
  %v2033 = vmax.f32 %v1476, 0.0
  %v2034 = vmax.f32 %v1479, 0.0
  %v2035 = vmax.f32 %v1481, 0.0
  %v2036 = vmax.f32 %v1484, 0.0
  %v2037 = vmax.f32 %v1486, 0.0
  %v2038 = vmax.f32 %v1489, 0.0
  %v2039 = vmax.f32 %v1491, 0.0
  %v2040 = vmax.f32 %v1494, 0.0
  %v2041 = vmax.f32 %v1496, 0.0
  %v2042 = vmax.f32 %v1499, 0.0
  %v2043 = vmax.f32 %v1501, 0.0
  %v2044 = vmax.f32 %v1504, 0.0
  %v2045 = vmax.f32 %v1506, 0.0
  %v2046 = vmax.f32 %v1509, 0.0
  %v2047 = vmax.f32 %v1511, 0.0
  %v2048 = vmax.f32 %v1514, 0.0
  %v2049 = vmax.f32 %v1516, 0.0
  %v2050 = vmax.f32 %v1519, 0.0
  %v2051 = vmax.f32 %v1521, 0.0
  %v2052 = vmax.f32 %v1524, 0.0
  %v2053 = vmax.f32 %v1526, 0.0
  %v2054 = vmax.f32 %v1529, 0.0
  %v2055 = vmax.f32 %v1531, 0.0
  %v2056 = vmax.f32 %v1534, 0.0
  %v2057 = vmax.f32 %v1536, 0.0
  %v2058 = vmax.f32 %v1539, 0.0
  %v2059 = vmax.f32 %v1541, 0.0
  %v2060 = vmax.f32 %v1544, 0.0
  %v2061 = vmax.f32 %v1546, 0.0
  %v2062 = vmax.f32 %v1549, 0.0
  %v2063 = vmax.f32 %v1551, 0.0
  %v2064 = vmax.f32 %v1554, 0.0
  %v2065 = vmax.f32 %v1556, 0.0
  %v2066 = vmax.f32 %v1559, 0.0
  %v2067 = vmax.f32 %v1561, 0.0
  %v2068 = vmax.f32 %v1564, 0.0
  %v2069 = vmax.f32 %v1566, 0.0
  %v2070 = vmax.f32 %v1569, 0.0
  %v2071 = vmax.f32 %v1571, 0.0
  %v2072 = vmax.f32 %v1574, 0.0
  %v2073 = vmax.f32 %v1576, 0.0
  %v2074 = vmax.f32 %v1579, 0.0
  %v2075 = vmax.f32 %v1581, 0.0
  %v2076 = vmax.f32 %v1584, 0.0
  %v2077 = vmax.f32 %v1586, 0.0
  %v2078 = vmax.f32 %v1589, 0.0
  %v2079 = vmax.f32 %v1591, 0.0
  %v2080 = vmax.f32 %v1594, 0.0
  %v2081 = vmax.f32 %v1596, 0.0
  %v2082 = vmax.f32 %v1599, 0.0
  %v2083 = vmax.f32 %v1601, 0.0
  %v2084 = vmax.f32 %v1604, 0.0
  %v2085 = vmax.f32 %v1606, 0.0
  %v2086 = vmax.f32 %v1609, 0.0
  %v2087 = vmax.f32 %v1611, 0.0
  %v2088 = vmax.f32 %v1614, 0.0
  %v2089 = vmax.f32 %v1616, 0.0
  %v2090 = vmax.f32 %v1619, 0.0
  %v2091 = vmax.f32 %v1621, 0.0
  %v2092 = vmax.f32 %v1624, 0.0
  %v2093 = vmax.f32 %v1626, 0.0
  %v2094 = vmax.f32 %v1629, 0.0
  %v2095 = vmax.f32 %v1631, 0.0
  %v2096 = vmax.f32 %v1634, 0.0
  %v2097 = vmax.f32 %v1636, 0.0
  %v2098 = vmax.f32 %v1639, 0.0
  %v2099 = vmax.f32 %v1641, 0.0
  %v2100 = vmax.f32 %v1644, 0.0
  %v2101 = vmax.f32 %v1646, 0.0
  %v2102 = vmax.f32 %v1649, 0.0
  %v2103 = vmax.f32 %v1651, 0.0
  %v2104 = vmax.f32 %v1654, 0.0
  %v2105 = vmax.f32 %v1656, 0.0
  %v2106 = vmax.f32 %v1659, 0.0
  %v2107 = vmax.f32 %v1661, 0.0
  %v2108 = vmax.f32 %v1664, 0.0
  %v2109 = vmax.f32 %v1666, 0.0
  %v2110 = vmax.f32 %v1669, 0.0
  %v2111 = vmax.f32 %v1671, 0.0
  %v2112 = vmax.f32 %v1674, 0.0
  %v2113 = vmax.f32 %v1676, 0.0
  %v2114 = vmax.f32 %v1679, 0.0
  %v2115 = vmax.f32 %v1681, 0.0
  %v2116 = vmax.f32 %v1684, 0.0
  %v2117 = vmax.f32 %v1686, 0.0
  %v2118 = vmax.f32 %v1689, 0.0
  %v2119 = vmax.f32 %v1691, 0.0
  %v2120 = vmax.f32 %v1694, 0.0
  %v2121 = vmax.f32 %v1696, 0.0
  %v2122 = vmax.f32 %v1699, 0.0
  %v2123 = vmax.f32 %v1701, 0.0
  %v2124 = vmax.f32 %v1704, 0.0
  %v2125 = vmax.f32 %v1706, 0.0
  %v2126 = vmax.f32 %v1709, 0.0
  %v2127 = vmax.f32 %v1711, 0.0
  %v2128 = vmax.f32 %v1714, 0.0
  %v2129 = vmax.f32 %v1716, 0.0
  %v2130 = vmax.f32 %v1719, 0.0
  %v2131 = vmax.f32 %v1721, 0.0
  %v2132 = vmax.f32 %v1724, 0.0
  %v2133 = vmax.f32 %v1726, 0.0
  %v2134 = vmax.f32 %v1729, 0.0
  %v2135 = vmax.f32 %v1731, 0.0
  %v2136 = vmax.f32 %v1734, 0.0
  %v2137 = vmax.f32 %v1736, 0.0
  %v2138 = vmax.f32 %v1739, 0.0
  %v2139 = vmax.f32 %v1741, 0.0
  %v2140 = vmax.f32 %v1744, 0.0
  %v2141 = vmax.f32 %v1746, 0.0
  %v2142 = vmax.f32 %v1749, 0.0
  %v2143 = vmax.f32 %v1751, 0.0
  %v2144 = vmax.f32 %v1754, 0.0
  %v2145 = vmax.f32 %v1756, 0.0
  %v2146 = vmax.f32 %v1759, 0.0
  %v2147 = vmax.f32 %v1761, 0.0
  %v2148 = vmax.f32 %v1764, 0.0
  %v2149 = vmax.f32 %v1766, 0.0
  %v2150 = vmax.f32 %v1769, 0.0
  %v2151 = vmax.f32 %v1771, 0.0
  %v2152 = vmax.f32 %v1774, 0.0
  %v2153 = vmax.f32 %v1776, 0.0
  %v2154 = vmax.f32 %v1779, 0.0
  %v2155 = vmax.f32 %v1781, 0.0
  %v2156 = vmax.f32 %v1784, 0.0
  %v2157 = vmax.f32 %v1786, 0.0
  %v2158 = vmax.f32 %v1789, 0.0
  %v2159 = vmax.f32 %v1791, 0.0
  %v2160 = vmax.f32 %v1794, 0.0
  %v2161 = vmax.f32 %v1796, 0.0
  %v2162 = vmax.f32 %v1799, 0.0
  %v2163 = vmax.f32 %v1801, 0.0
  %v2164 = vmax.f32 %v1804, 0.0
  %v2165 = vmax.f32 %v1806, 0.0
  %v2166 = vmax.f32 %v1809, 0.0
  %v2167 = vmax.f32 %v1811, 0.0
  %v2168 = vmax.f32 %v1814, 0.0
  %v2169 = vmax.f32 %v1816, 0.0
  %v2170 = vmax.f32 %v1819, 0.0
  %v2171 = vmax.f32 %v1821, 0.0
  %v2172 = vmax.f32 %v1824, 0.0
  %v2173 = vmax.f32 %v1826, 0.0
  %v2174 = vmax.f32 %v1829, 0.0
  %v2175 = vmax.f32 %v1831, 0.0
  %v2176 = vmax.f32 %v1834, 0.0
  %v2177 = vmax.f32 %v1836, 0.0
  %v2178 = vmax.f32 %v1839, 0.0
  %v2179 = vmax.f32 %v1841, 0.0
  %v2180 = vmax.f32 %v1844, 0.0
  %v2181 = vmax.f32 %v1846, 0.0
  %v2182 = vmax.f32 %v1849, 0.0
  %v2183 = vmax.f32 %v1851, 0.0
  %v2184 = vmax.f32 %v1854, 0.0
  %v2185 = vmax.f32 %v1856, 0.0
  %v2186 = vmax.f32 %v1859, 0.0
  %v2187 = vmax.f32 %v1861, 0.0
  %v2188 = vmax.f32 %v1864, 0.0
  %v2189 = vmax.f32 %v1866, 0.0
  %v2190 = vmax.f32 %v1869, 0.0
  %v2191 = vmax.f32 %v1871, 0.0
  %v2192 = vmax.f32 %v1874, 0.0
  %v2193 = vmax.f32 %v1876, 0.0
  %v2194 = vmax.f32 %v1879, 0.0
  %v2195 = vmax.f32 %v1881, 0.0
  %v2196 = vmax.f32 %v1884, 0.0
  %v2197 = vmax.f32 %v1886, 0.0
  %v2198 = vmax.f32 %v1889, 0.0
  %v2199 = vmax.f32 %v1891, 0.0
  %v2200 = vmax.f32 %v1894, 0.0
  %v2201 = vmax.f32 %v1896, 0.0
  %v2202 = vmax.f32 %v1899, 0.0
  %v2203 = vmax.f32 %v1901, 0.0
  %v2204 = vmax.f32 %v1904, 0.0
  %v2205 = vmax.f32 %v1906, 0.0
  %v2206 = vmax.f32 %v1909, 0.0
  %v2207 = vmax.f32 %v1911, 0.0
  %v2208 = vmax.f32 %v1914, 0.0
  %v2209 = vmax.f32 %v1916, 0.0
  %v2210 = vmax.f32 %v1919, 0.0
  %v2211 = vmax.f32 %v1921, 0.0
  %v2212 = vmax.f32 %v1924, 0.0
  %v2213 = vmax.f32 %v1926, 0.0
  %v2214 = vmax.f32 %v1929, 0.0
  %v2215 = vmax.f32 %v1931, 0.0
  %v2216 = vmax.f32 %v1934, 0.0
  %v2217 = vmax.f32 %v1936, 0.0
  %v2218 = vmax.f32 %v1939, 0.0
  %v2219 = vmax.f32 %v1941, 0.0
  %v2220 = vmax.f32 %v1944, 0.0
  %v2221 = vmax.f32 %v1946, 0.0
  %v2222 = vmax.f32 %v1949, 0.0
  %v2223 = vmax.f32 %v1951, 0.0
  %v2224 = vmax.f32 %v1954, 0.0
  %v2225 = vmax.f32 %v1956, 0.0
  %v2226 = vmax.f32 %v1959, 0.0
  %v2227 = vmax.f32 %v1961, 0.0
  %v2228 = vmax.f32 %v1964, 0.0
  %v2229 = vmax.f32 %v1966, 0.0
  %v2230 = vmax.f32 %v1969, 0.0
  %v2231 = vmax.f32 %v1971, 0.0
  %v2232 = vmax.f32 %v1974, 0.0
  %v2233 = vmax.f32 %v1976, 0.0
  %v2234 = vld [vmem:[%s2] sm:$0xff]
  %v2235 = vld [vmem:[%s2 + $0x8] sm:$0xff]
  %v2236 = vld [vmem:[%s2 + $0x10] sm:$0xff]
  %v2237 = vld [vmem:[%s2 + $0x18] sm:$0xff]
  %v2238 = vld [vmem:[%s2 + $0x20] sm:$0xff]
  %v2239 = vld [vmem:[%s2 + $0x28] sm:$0xff]
  %v2240 = vld [vmem:[%s2 + $0x30] sm:$0xff]
  %v2241 = vld [vmem:[%s2 + $0x38] sm:$0xff]
  %v2242 = vld [vmem:[%s2 + $0x40] sm:$0xff]
  %v2243 = vld [vmem:[%s2 + $0x48] sm:$0xff]
  %v2244 = vld [vmem:[%s2 + $0x50] sm:$0xff]
  %v2245 = vld [vmem:[%s2 + $0x58] sm:$0xff]
  %v2246 = vld [vmem:[%s2 + $0x60] sm:$0xff]
  %v2247 = vld [vmem:[%s2 + $0x68] sm:$0xff]
  %v2248 = vld [vmem:[%s2 + $0x70] sm:$0xff]
  %v2249 = vld [vmem:[%s2 + $0x78] sm:$0xff]
  %v2250 = vld [vmem:[%s2 + $0x80] sm:$0xff]
  %v2251 = vld [vmem:[%s2 + $0x88] sm:$0xff]
  %v2252 = vld [vmem:[%s2 + $0x90] sm:$0xff]
  %v2253 = vld [vmem:[%s2 + $0x98] sm:$0xff]
  %v2254 = vld [vmem:[%s2 + $0xa0] sm:$0xff]
  %v2255 = vld [vmem:[%s2 + $0xa8] sm:$0xff]
  %v2256 = vld [vmem:[%s2 + $0xb0] sm:$0xff]
  %v2257 = vld [vmem:[%s2 + $0xb8] sm:$0xff]
  %v2258 = vld [vmem:[%s2 + $0xc0] sm:$0xff]
  %v2259 = vld [vmem:[%s2 + $0xc8] sm:$0xff]
  %v2260 = vld [vmem:[%s2 + $0xd0] sm:$0xff]
  %v2261 = vld [vmem:[%s2 + $0xd8] sm:$0xff]
  %v2262 = vld [vmem:[%s2 + $0xe0] sm:$0xff]
  %v2263 = vld [vmem:[%s2 + $0xe8] sm:$0xff]
  %v2264 = vld [vmem:[%s2 + $0xf0] sm:$0xff]
  %v2265 = vld [vmem:[%s2 + $0xf8] sm:$0xff]
  %v2266 = vpack.c.bf16 %v1979, %v1978
  %v2267 = vpack.c.bf16 %v1981, %v1980
  %v2268 = vpack.c.bf16 %v1983, %v1982
  %v2269 = vpack.c.bf16 %v1985, %v1984
  %v2270 = vpack.c.bf16 %v1987, %v1986
  %v2271 = vpack.c.bf16 %v1989, %v1988
  %v2272 = vpack.c.bf16 %v1991, %v1990
  %v2273 = vpack.c.bf16 %v1993, %v1992
  %v2274 = vpack.c.bf16 %v1995, %v1994
  %v2275 = vpack.c.bf16 %v1997, %v1996
  %v2276 = vpack.c.bf16 %v1999, %v1998
  %v2277 = vpack.c.bf16 %v2001, %v2000
  %v2278 = vpack.c.bf16 %v2003, %v2002
  %v2279 = vpack.c.bf16 %v2005, %v2004
  %v2280 = vpack.c.bf16 %v2007, %v2006
  %v2281 = vpack.c.bf16 %v2009, %v2008
  %v2282 = vpack.c.bf16 %v2011, %v2010
  %v2283 = vpack.c.bf16 %v2013, %v2012
  %v2284 = vpack.c.bf16 %v2015, %v2014
  %v2285 = vpack.c.bf16 %v2017, %v2016
  %v2286 = vpack.c.bf16 %v2019, %v2018
  %v2287 = vpack.c.bf16 %v2021, %v2020
  %v2288 = vpack.c.bf16 %v2023, %v2022
  %v2289 = vpack.c.bf16 %v2025, %v2024
  %v2290 = vpack.c.bf16 %v2027, %v2026
  %v2291 = vpack.c.bf16 %v2029, %v2028
  %v2292 = vpack.c.bf16 %v2031, %v2030
  %v2293 = vpack.c.bf16 %v2033, %v2032
  %v2294 = vpack.c.bf16 %v2035, %v2034
  %v2295 = vpack.c.bf16 %v2037, %v2036
  %v2296 = vpack.c.bf16 %v2039, %v2038
  %v2297 = vpack.c.bf16 %v2041, %v2040
  %v2298 = vpack.c.bf16 %v2043, %v2042
  %v2299 = vpack.c.bf16 %v2045, %v2044
  %v2300 = vpack.c.bf16 %v2047, %v2046
  %v2301 = vpack.c.bf16 %v2049, %v2048
  %v2302 = vpack.c.bf16 %v2051, %v2050
  %v2303 = vpack.c.bf16 %v2053, %v2052
  %v2304 = vpack.c.bf16 %v2055, %v2054
  %v2305 = vpack.c.bf16 %v2057, %v2056
  %v2306 = vpack.c.bf16 %v2059, %v2058
  %v2307 = vpack.c.bf16 %v2061, %v2060
  %v2308 = vpack.c.bf16 %v2063, %v2062
  %v2309 = vpack.c.bf16 %v2065, %v2064
  %v2310 = vpack.c.bf16 %v2067, %v2066
  %v2311 = vpack.c.bf16 %v2069, %v2068
  %v2312 = vpack.c.bf16 %v2071, %v2070
  %v2313 = vpack.c.bf16 %v2073, %v2072
  %v2314 = vpack.c.bf16 %v2075, %v2074
  %v2315 = vpack.c.bf16 %v2077, %v2076
  %v2316 = vpack.c.bf16 %v2079, %v2078
  %v2317 = vpack.c.bf16 %v2081, %v2080
  %v2318 = vpack.c.bf16 %v2083, %v2082
  %v2319 = vpack.c.bf16 %v2085, %v2084
  %v2320 = vpack.c.bf16 %v2087, %v2086
  %v2321 = vpack.c.bf16 %v2089, %v2088
  %v2322 = vpack.c.bf16 %v2091, %v2090
  %v2323 = vpack.c.bf16 %v2093, %v2092
  %v2324 = vpack.c.bf16 %v2095, %v2094
  %v2325 = vpack.c.bf16 %v2097, %v2096
  %v2326 = vpack.c.bf16 %v2099, %v2098
  %v2327 = vpack.c.bf16 %v2101, %v2100
  %v2328 = vpack.c.bf16 %v2103, %v2102
  %v2329 = vpack.c.bf16 %v2105, %v2104
  %v2330 = vpack.c.bf16 %v2107, %v2106
  %v2331 = vpack.c.bf16 %v2109, %v2108
  %v2332 = vpack.c.bf16 %v2111, %v2110
  %v2333 = vpack.c.bf16 %v2113, %v2112
  %v2334 = vpack.c.bf16 %v2115, %v2114
  %v2335 = vpack.c.bf16 %v2117, %v2116
  %v2336 = vpack.c.bf16 %v2119, %v2118
  %v2337 = vpack.c.bf16 %v2121, %v2120
  %v2338 = vpack.c.bf16 %v2123, %v2122
  %v2339 = vpack.c.bf16 %v2125, %v2124
  %v2340 = vpack.c.bf16 %v2127, %v2126
  %v2341 = vpack.c.bf16 %v2129, %v2128
  %v2342 = vpack.c.bf16 %v2131, %v2130
  %v2343 = vpack.c.bf16 %v2133, %v2132
  %v2344 = vpack.c.bf16 %v2135, %v2134
  %v2345 = vpack.c.bf16 %v2137, %v2136
  %v2346 = vpack.c.bf16 %v2139, %v2138
  %v2347 = vpack.c.bf16 %v2141, %v2140
  %v2348 = vpack.c.bf16 %v2143, %v2142
  %v2349 = vpack.c.bf16 %v2145, %v2144
  %v2350 = vpack.c.bf16 %v2147, %v2146
  %v2351 = vpack.c.bf16 %v2149, %v2148
  %v2352 = vpack.c.bf16 %v2151, %v2150
  %v2353 = vpack.c.bf16 %v2153, %v2152
  %v2354 = vpack.c.bf16 %v2155, %v2154
  %v2355 = vpack.c.bf16 %v2157, %v2156
  %v2356 = vpack.c.bf16 %v2159, %v2158
  %v2357 = vpack.c.bf16 %v2161, %v2160
  %v2358 = vpack.c.bf16 %v2163, %v2162
  %v2359 = vpack.c.bf16 %v2165, %v2164
  %v2360 = vpack.c.bf16 %v2167, %v2166
  %v2361 = vpack.c.bf16 %v2169, %v2168
  %v2362 = vpack.c.bf16 %v2171, %v2170
  %v2363 = vpack.c.bf16 %v2173, %v2172
  %v2364 = vpack.c.bf16 %v2175, %v2174
  %v2365 = vpack.c.bf16 %v2177, %v2176
  %v2366 = vpack.c.bf16 %v2179, %v2178
  %v2367 = vpack.c.bf16 %v2181, %v2180
  %v2368 = vpack.c.bf16 %v2183, %v2182
  %v2369 = vpack.c.bf16 %v2185, %v2184
  %v2370 = vpack.c.bf16 %v2187, %v2186
  %v2371 = vpack.c.bf16 %v2189, %v2188
  %v2372 = vpack.c.bf16 %v2191, %v2190
  %v2373 = vpack.c.bf16 %v2193, %v2192
  %v2374 = vpack.c.bf16 %v2195, %v2194
  %v2375 = vpack.c.bf16 %v2197, %v2196
  %v2376 = vpack.c.bf16 %v2199, %v2198
  %v2377 = vpack.c.bf16 %v2201, %v2200
  %v2378 = vpack.c.bf16 %v2203, %v2202
  %v2379 = vpack.c.bf16 %v2205, %v2204
  %v2380 = vpack.c.bf16 %v2207, %v2206
  %v2381 = vpack.c.bf16 %v2209, %v2208
  %v2382 = vpack.c.bf16 %v2211, %v2210
  %v2383 = vpack.c.bf16 %v2213, %v2212
  %v2384 = vpack.c.bf16 %v2215, %v2214
  %v2385 = vpack.c.bf16 %v2217, %v2216
  %v2386 = vpack.c.bf16 %v2219, %v2218
  %v2387 = vpack.c.bf16 %v2221, %v2220
  %v2388 = vpack.c.bf16 %v2223, %v2222
  %v2389 = vpack.c.bf16 %v2225, %v2224
  %v2390 = vpack.c.bf16 %v2227, %v2226
  %v2391 = vpack.c.bf16 %v2229, %v2228
  %v2392 = vpack.c.bf16 %v2231, %v2230
  %v2393 = vpack.c.bf16 %v2233, %v2232
  %v2426 = vunpack.c.l.b16 %v2234
  %v2427 = vunpack.c.h.b16 %v2234
  %v2428 = vunpack.c.l.b16 %v2235
  %v2429 = vunpack.c.h.b16 %v2235
  %v2430 = vunpack.c.l.b16 %v2236
  %v2431 = vunpack.c.h.b16 %v2236
  %v2432 = vunpack.c.l.b16 %v2237
  %v2433 = vunpack.c.h.b16 %v2237
  %v2434 = vunpack.c.l.b16 %v2238
  %v2435 = vunpack.c.h.b16 %v2238
  %v2436 = vunpack.c.l.b16 %v2239
  %v2437 = vunpack.c.h.b16 %v2239
  %v2438 = vunpack.c.l.b16 %v2240
  %v2439 = vunpack.c.h.b16 %v2240
  %v2440 = vunpack.c.l.b16 %v2241
  %v2441 = vunpack.c.h.b16 %v2241
  %v2442 = vunpack.c.l.b16 %v2242
  %v2443 = vunpack.c.h.b16 %v2242
  %v2444 = vunpack.c.l.b16 %v2243
  %v2445 = vunpack.c.h.b16 %v2243
  %v2446 = vunpack.c.l.b16 %v2244
  %v2447 = vunpack.c.h.b16 %v2244
  %v2448 = vunpack.c.l.b16 %v2245
  %v2449 = vunpack.c.h.b16 %v2245
  %v2450 = vunpack.c.l.b16 %v2246
  %v2451 = vunpack.c.h.b16 %v2246
  %v2452 = vunpack.c.l.b16 %v2247
  %v2453 = vunpack.c.h.b16 %v2247
  %v2454 = vunpack.c.l.b16 %v2248
  %v2455 = vunpack.c.h.b16 %v2248
  %v2456 = vunpack.c.l.b16 %v2249
  %v2457 = vunpack.c.h.b16 %v2249
  %v2458 = vunpack.c.l.b16 %v2250
  %v2459 = vunpack.c.h.b16 %v2250
  %v2460 = vunpack.c.l.b16 %v2251
  %v2461 = vunpack.c.h.b16 %v2251
  %v2462 = vunpack.c.l.b16 %v2252
  %v2463 = vunpack.c.h.b16 %v2252
  %v2464 = vunpack.c.l.b16 %v2253
  %v2465 = vunpack.c.h.b16 %v2253
  %v2466 = vunpack.c.l.b16 %v2254
  %v2467 = vunpack.c.h.b16 %v2254
  %v2468 = vunpack.c.l.b16 %v2255
  %v2469 = vunpack.c.h.b16 %v2255
  %v2470 = vunpack.c.l.b16 %v2256
  %v2471 = vunpack.c.h.b16 %v2256
  %v2472 = vunpack.c.l.b16 %v2257
  %v2473 = vunpack.c.h.b16 %v2257
  %v2474 = vunpack.c.l.b16 %v2258
  %v2475 = vunpack.c.h.b16 %v2258
  %v2476 = vunpack.c.l.b16 %v2259
  %v2477 = vunpack.c.h.b16 %v2259
  %v2478 = vunpack.c.l.b16 %v2260
  %v2479 = vunpack.c.h.b16 %v2260
  %v2480 = vunpack.c.l.b16 %v2261
  %v2481 = vunpack.c.h.b16 %v2261
  %v2482 = vunpack.c.l.b16 %v2262
  %v2483 = vunpack.c.h.b16 %v2262
  %v2484 = vunpack.c.l.b16 %v2263
  %v2485 = vunpack.c.h.b16 %v2263
  %v2486 = vunpack.c.l.b16 %v2264
  %v2487 = vunpack.c.h.b16 %v2264
  %v2488 = vunpack.c.l.b16 %v2265
  %v2489 = vunpack.c.h.b16 %v2265
  %v2490 = vpack.c.b16 %v2442, %v2426
  %v2491 = vpack.c.b16 %v2443, %v2427
  %v2492 = vpack.c.b16 %v2444, %v2428
  %v2493 = vpack.c.b16 %v2445, %v2429
  %v2494 = vpack.c.b16 %v2446, %v2430
  %v2495 = vpack.c.b16 %v2447, %v2431
  %v2496 = vpack.c.b16 %v2448, %v2432
  %v2497 = vpack.c.b16 %v2449, %v2433
  %v2498 = vpack.c.b16 %v2450, %v2434
  %v2499 = vpack.c.b16 %v2451, %v2435
  %v2500 = vpack.c.b16 %v2452, %v2436
  %v2501 = vpack.c.b16 %v2453, %v2437
  %v2502 = vpack.c.b16 %v2454, %v2438
  %v2503 = vpack.c.b16 %v2455, %v2439
  %v2504 = vpack.c.b16 %v2456, %v2440
  %v2505 = vpack.c.b16 %v2457, %v2441
  %v2506 = vpack.c.b16 %v2474, %v2458
  %v2507 = vpack.c.b16 %v2475, %v2459
  %v2508 = vpack.c.b16 %v2476, %v2460
  %v2509 = vpack.c.b16 %v2477, %v2461
  %v2510 = vpack.c.b16 %v2478, %v2462
  %v2511 = vpack.c.b16 %v2479, %v2463
  %v2512 = vpack.c.b16 %v2480, %v2464
  %v2513 = vpack.c.b16 %v2481, %v2465
  %v2514 = vpack.c.b16 %v2482, %v2466
  %v2515 = vpack.c.b16 %v2483, %v2467
  %v2516 = vpack.c.b16 %v2484, %v2468
  %v2517 = vpack.c.b16 %v2485, %v2469
  %v2518 = vpack.c.b16 %v2486, %v2470
  %v2519 = vpack.c.b16 %v2487, %v2471
  %v2520 = vpack.c.b16 %v2488, %v2472
  %v2521 = vpack.c.b16 %v2489, %v2473
  %2554 = vmatpush.bf16.msra.mxu0 %v2273
  %2555 = vmatpush.bf16.msra.mxu0 %v2272
  %2556 = vmatpush.bf16.msra.mxu0 %v2271
  %2557 = vmatpush.bf16.msra.mxu0 %v2270
  %2558 = vmatpush.bf16.msra.mxu0 %v2269
  %2559 = vmatpush.bf16.msra.mxu0 %v2268
  %2560 = vmatpush.bf16.msra.mxu0 %v2267
  %2561 = vmatpush.bf16.msra.mxu0 %v2266
  %2562 = vmatmul.bf16.gmra.mxu0 %v2490
  %v2563 = vpop.f32.mrf.mxu0
  %v2564 = vadd.f32 0.0, %v2563
  %v2565 = vpop.f32.mrf.mxu0
  %v2566 = vadd.f32 0.0, %v2565
  %2567 = vmatmul.bf16.gmra.mxu0 %v2506
  %v2568 = vpop.f32.mrf.mxu0
  %v2569 = vadd.f32 0.0, %v2568
  %v2570 = vpop.f32.mrf.mxu0
  %v2571 = vadd.f32 0.0, %v2570
  %2572 = vdwg.mxu0
  %2573 = vmatpush.bf16.msra.mxu0 %v2281
  %2574 = vmatpush.bf16.msra.mxu0 %v2280
  %2575 = vmatpush.bf16.msra.mxu0 %v2279
  %2576 = vmatpush.bf16.msra.mxu0 %v2278
  %2577 = vmatpush.bf16.msra.mxu0 %v2277
  %2578 = vmatpush.bf16.msra.mxu0 %v2276
  %2579 = vmatpush.bf16.msra.mxu0 %v2275
  %2580 = vmatpush.bf16.msra.mxu0 %v2274
  %2581 = vmatmul.bf16.gmra.mxu0 %v2491
  %v2582 = vpop.f32.mrf.mxu0
  %v2583 = vadd.f32 %v2564, %v2582
  %v2584 = vpop.f32.mrf.mxu0
  %v2585 = vadd.f32 %v2566, %v2584
  %2586 = vmatmul.bf16.gmra.mxu0 %v2507
  %v2587 = vpop.f32.mrf.mxu0
  %v2588 = vadd.f32 %v2569, %v2587
  %v2589 = vpop.f32.mrf.mxu0
  %v2590 = vadd.f32 %v2571, %v2589
  %2591 = vdwg.mxu0
  %2592 = vmatpush.bf16.msra.mxu0 %v2289
  %2593 = vmatpush.bf16.msra.mxu0 %v2288
  %2594 = vmatpush.bf16.msra.mxu0 %v2287
  %2595 = vmatpush.bf16.msra.mxu0 %v2286
  %2596 = vmatpush.bf16.msra.mxu0 %v2285
  %2597 = vmatpush.bf16.msra.mxu0 %v2284
  %2598 = vmatpush.bf16.msra.mxu0 %v2283
  %2599 = vmatpush.bf16.msra.mxu0 %v2282
  %2600 = vmatmul.bf16.gmra.mxu0 %v2492
  %v2601 = vpop.f32.mrf.mxu0
  %v2602 = vadd.f32 %v2583, %v2601
  %v2603 = vpop.f32.mrf.mxu0
  %v2604 = vadd.f32 %v2585, %v2603
  %2605 = vmatmul.bf16.gmra.mxu0 %v2508
  %v2606 = vpop.f32.mrf.mxu0
  %v2607 = vadd.f32 %v2588, %v2606
  %v2608 = vpop.f32.mrf.mxu0
  %v2609 = vadd.f32 %v2590, %v2608
  %2610 = vdwg.mxu0
  %2611 = vmatpush.bf16.msra.mxu0 %v2297
  %2612 = vmatpush.bf16.msra.mxu0 %v2296
  %2613 = vmatpush.bf16.msra.mxu0 %v2295
  %2614 = vmatpush.bf16.msra.mxu0 %v2294
  %2615 = vmatpush.bf16.msra.mxu0 %v2293
  %2616 = vmatpush.bf16.msra.mxu0 %v2292
  %2617 = vmatpush.bf16.msra.mxu0 %v2291
  %2618 = vmatpush.bf16.msra.mxu0 %v2290
  %2619 = vmatmul.bf16.gmra.mxu0 %v2493
  %v2620 = vpop.f32.mrf.mxu0
  %v2621 = vadd.f32 %v2602, %v2620
  %v2622 = vpop.f32.mrf.mxu0
  %v2623 = vadd.f32 %v2604, %v2622
  %2624 = vmatmul.bf16.gmra.mxu0 %v2509
  %v2625 = vpop.f32.mrf.mxu0
  %v2626 = vadd.f32 %v2607, %v2625
  %v2627 = vpop.f32.mrf.mxu0
  %v2628 = vadd.f32 %v2609, %v2627
  %2629 = vdwg.mxu0
  %2630 = vmatpush.bf16.msra.mxu0 %v2305
  %2631 = vmatpush.bf16.msra.mxu0 %v2304
  %2632 = vmatpush.bf16.msra.mxu0 %v2303
  %2633 = vmatpush.bf16.msra.mxu0 %v2302
  %2634 = vmatpush.bf16.msra.mxu0 %v2301
  %2635 = vmatpush.bf16.msra.mxu0 %v2300
  %2636 = vmatpush.bf16.msra.mxu0 %v2299
  %2637 = vmatpush.bf16.msra.mxu0 %v2298
  %2638 = vmatmul.bf16.gmra.mxu0 %v2494
  %v2639 = vpop.f32.mrf.mxu0
  %v2640 = vadd.f32 %v2621, %v2639
  %v2641 = vpop.f32.mrf.mxu0
  %v2642 = vadd.f32 %v2623, %v2641
  %2643 = vmatmul.bf16.gmra.mxu0 %v2510
  %v2644 = vpop.f32.mrf.mxu0
  %v2645 = vadd.f32 %v2626, %v2644
  %v2646 = vpop.f32.mrf.mxu0
  %v2647 = vadd.f32 %v2628, %v2646
  %2648 = vdwg.mxu0
  %2649 = vmatpush.bf16.msra.mxu0 %v2313
  %2650 = vmatpush.bf16.msra.mxu0 %v2312
  %2651 = vmatpush.bf16.msra.mxu0 %v2311
  %2652 = vmatpush.bf16.msra.mxu0 %v2310
  %2653 = vmatpush.bf16.msra.mxu0 %v2309
  %2654 = vmatpush.bf16.msra.mxu0 %v2308
  %2655 = vmatpush.bf16.msra.mxu0 %v2307
  %2656 = vmatpush.bf16.msra.mxu0 %v2306
  %2657 = vmatmul.bf16.gmra.mxu0 %v2495
  %v2658 = vpop.f32.mrf.mxu0
  %v2659 = vadd.f32 %v2640, %v2658
  %v2660 = vpop.f32.mrf.mxu0
  %v2661 = vadd.f32 %v2642, %v2660
  %2662 = vmatmul.bf16.gmra.mxu0 %v2511
  %v2663 = vpop.f32.mrf.mxu0
  %v2664 = vadd.f32 %v2645, %v2663
  %v2665 = vpop.f32.mrf.mxu0
  %v2666 = vadd.f32 %v2647, %v2665
  %2667 = vdwg.mxu0
  %2668 = vmatpush.bf16.msra.mxu0 %v2321
  %2669 = vmatpush.bf16.msra.mxu0 %v2320
  %2670 = vmatpush.bf16.msra.mxu0 %v2319
  %2671 = vmatpush.bf16.msra.mxu0 %v2318
  %2672 = vmatpush.bf16.msra.mxu0 %v2317
  %2673 = vmatpush.bf16.msra.mxu0 %v2316
  %2674 = vmatpush.bf16.msra.mxu0 %v2315
  %2675 = vmatpush.bf16.msra.mxu0 %v2314
  %2676 = vmatmul.bf16.gmra.mxu0 %v2496
  %v2677 = vpop.f32.mrf.mxu0
  %v2678 = vadd.f32 %v2659, %v2677
  %v2679 = vpop.f32.mrf.mxu0
  %v2680 = vadd.f32 %v2661, %v2679
  %2681 = vmatmul.bf16.gmra.mxu0 %v2512
  %v2682 = vpop.f32.mrf.mxu0
  %v2683 = vadd.f32 %v2664, %v2682
  %v2684 = vpop.f32.mrf.mxu0
  %v2685 = vadd.f32 %v2666, %v2684
  %2686 = vdwg.mxu0
  %2687 = vmatpush.bf16.msra.mxu0 %v2329
  %2688 = vmatpush.bf16.msra.mxu0 %v2328
  %2689 = vmatpush.bf16.msra.mxu0 %v2327
  %2690 = vmatpush.bf16.msra.mxu0 %v2326
  %2691 = vmatpush.bf16.msra.mxu0 %v2325
  %2692 = vmatpush.bf16.msra.mxu0 %v2324
  %2693 = vmatpush.bf16.msra.mxu0 %v2323
  %2694 = vmatpush.bf16.msra.mxu0 %v2322
  %2695 = vmatmul.bf16.gmra.mxu0 %v2497
  %v2696 = vpop.f32.mrf.mxu0
  %v2697 = vadd.f32 %v2678, %v2696
  %v2698 = vpop.f32.mrf.mxu0
  %v2699 = vadd.f32 %v2680, %v2698
  %2700 = vmatmul.bf16.gmra.mxu0 %v2513
  %v2701 = vpop.f32.mrf.mxu0
  %v2702 = vadd.f32 %v2683, %v2701
  %v2703 = vpop.f32.mrf.mxu0
  %v2704 = vadd.f32 %v2685, %v2703
  %2705 = vdwg.mxu0
  %2706 = vmatpush.bf16.msra.mxu0 %v2337
  %2707 = vmatpush.bf16.msra.mxu0 %v2336
  %2708 = vmatpush.bf16.msra.mxu0 %v2335
  %2709 = vmatpush.bf16.msra.mxu0 %v2334
  %2710 = vmatpush.bf16.msra.mxu0 %v2333
  %2711 = vmatpush.bf16.msra.mxu0 %v2332
  %2712 = vmatpush.bf16.msra.mxu0 %v2331
  %2713 = vmatpush.bf16.msra.mxu0 %v2330
  %2714 = vmatmul.bf16.gmra.mxu0 %v2498
  %v2715 = vpop.f32.mrf.mxu0
  %v2716 = vadd.f32 %v2697, %v2715
  %v2717 = vpop.f32.mrf.mxu0
  %v2718 = vadd.f32 %v2699, %v2717
  %2719 = vmatmul.bf16.gmra.mxu0 %v2514
  %v2720 = vpop.f32.mrf.mxu0
  %v2721 = vadd.f32 %v2702, %v2720
  %v2722 = vpop.f32.mrf.mxu0
  %v2723 = vadd.f32 %v2704, %v2722
  %2724 = vdwg.mxu0
  %2725 = vmatpush.bf16.msra.mxu0 %v2345
  %2726 = vmatpush.bf16.msra.mxu0 %v2344
  %2727 = vmatpush.bf16.msra.mxu0 %v2343
  %2728 = vmatpush.bf16.msra.mxu0 %v2342
  %2729 = vmatpush.bf16.msra.mxu0 %v2341
  %2730 = vmatpush.bf16.msra.mxu0 %v2340
  %2731 = vmatpush.bf16.msra.mxu0 %v2339
  %2732 = vmatpush.bf16.msra.mxu0 %v2338
  %2733 = vmatmul.bf16.gmra.mxu0 %v2499
  %v2734 = vpop.f32.mrf.mxu0
  %v2735 = vadd.f32 %v2716, %v2734
  %v2736 = vpop.f32.mrf.mxu0
  %v2737 = vadd.f32 %v2718, %v2736
  %2738 = vmatmul.bf16.gmra.mxu0 %v2515
  %v2739 = vpop.f32.mrf.mxu0
  %v2740 = vadd.f32 %v2721, %v2739
  %v2741 = vpop.f32.mrf.mxu0
  %v2742 = vadd.f32 %v2723, %v2741
  %2743 = vdwg.mxu0
  %2744 = vmatpush.bf16.msra.mxu0 %v2353
  %2745 = vmatpush.bf16.msra.mxu0 %v2352
  %2746 = vmatpush.bf16.msra.mxu0 %v2351
  %2747 = vmatpush.bf16.msra.mxu0 %v2350
  %2748 = vmatpush.bf16.msra.mxu0 %v2349
  %2749 = vmatpush.bf16.msra.mxu0 %v2348
  %2750 = vmatpush.bf16.msra.mxu0 %v2347
  %2751 = vmatpush.bf16.msra.mxu0 %v2346
  %2752 = vmatmul.bf16.gmra.mxu0 %v2500
  %v2753 = vpop.f32.mrf.mxu0
  %v2754 = vadd.f32 %v2735, %v2753
  %v2755 = vpop.f32.mrf.mxu0
  %v2756 = vadd.f32 %v2737, %v2755
  %2757 = vmatmul.bf16.gmra.mxu0 %v2516
  %v2758 = vpop.f32.mrf.mxu0
  %v2759 = vadd.f32 %v2740, %v2758
  %v2760 = vpop.f32.mrf.mxu0
  %v2761 = vadd.f32 %v2742, %v2760
  %2762 = vdwg.mxu0
  %2763 = vmatpush.bf16.msra.mxu0 %v2361
  %2764 = vmatpush.bf16.msra.mxu0 %v2360
  %2765 = vmatpush.bf16.msra.mxu0 %v2359
  %2766 = vmatpush.bf16.msra.mxu0 %v2358
  %2767 = vmatpush.bf16.msra.mxu0 %v2357
  %2768 = vmatpush.bf16.msra.mxu0 %v2356
  %2769 = vmatpush.bf16.msra.mxu0 %v2355
  %2770 = vmatpush.bf16.msra.mxu0 %v2354
  %2771 = vmatmul.bf16.gmra.mxu0 %v2501
  %v2772 = vpop.f32.mrf.mxu0
  %v2773 = vadd.f32 %v2754, %v2772
  %v2774 = vpop.f32.mrf.mxu0
  %v2775 = vadd.f32 %v2756, %v2774
  %2776 = vmatmul.bf16.gmra.mxu0 %v2517
  %v2777 = vpop.f32.mrf.mxu0
  %v2778 = vadd.f32 %v2759, %v2777
  %v2779 = vpop.f32.mrf.mxu0
  %v2780 = vadd.f32 %v2761, %v2779
  %2781 = vdwg.mxu0
  %2782 = vmatpush.bf16.msra.mxu0 %v2369
  %2783 = vmatpush.bf16.msra.mxu0 %v2368
  %2784 = vmatpush.bf16.msra.mxu0 %v2367
  %2785 = vmatpush.bf16.msra.mxu0 %v2366
  %2786 = vmatpush.bf16.msra.mxu0 %v2365
  %2787 = vmatpush.bf16.msra.mxu0 %v2364
  %2788 = vmatpush.bf16.msra.mxu0 %v2363
  %2789 = vmatpush.bf16.msra.mxu0 %v2362
  %2790 = vmatmul.bf16.gmra.mxu0 %v2502
  %v2791 = vpop.f32.mrf.mxu0
  %v2792 = vadd.f32 %v2773, %v2791
  %v2793 = vpop.f32.mrf.mxu0
  %v2794 = vadd.f32 %v2775, %v2793
  %2795 = vmatmul.bf16.gmra.mxu0 %v2518
  %v2796 = vpop.f32.mrf.mxu0
  %v2797 = vadd.f32 %v2778, %v2796
  %v2798 = vpop.f32.mrf.mxu0
  %v2799 = vadd.f32 %v2780, %v2798
  %2800 = vdwg.mxu0
  %2801 = vmatpush.bf16.msra.mxu0 %v2377
  %2802 = vmatpush.bf16.msra.mxu0 %v2376
  %2803 = vmatpush.bf16.msra.mxu0 %v2375
  %2804 = vmatpush.bf16.msra.mxu0 %v2374
  %2805 = vmatpush.bf16.msra.mxu0 %v2373
  %2806 = vmatpush.bf16.msra.mxu0 %v2372
  %2807 = vmatpush.bf16.msra.mxu0 %v2371
  %2808 = vmatpush.bf16.msra.mxu0 %v2370
  %2809 = vmatmul.bf16.gmra.mxu0 %v2503
  %v2810 = vpop.f32.mrf.mxu0
  %v2811 = vadd.f32 %v2792, %v2810
  %v2812 = vpop.f32.mrf.mxu0
  %v2813 = vadd.f32 %v2794, %v2812
  %2814 = vmatmul.bf16.gmra.mxu0 %v2519
  %v2815 = vpop.f32.mrf.mxu0
  %v2816 = vadd.f32 %v2797, %v2815
  %v2817 = vpop.f32.mrf.mxu0
  %v2818 = vadd.f32 %v2799, %v2817
  %2819 = vdwg.mxu0
  %2820 = vmatpush.bf16.msra.mxu0 %v2385
  %2821 = vmatpush.bf16.msra.mxu0 %v2384
  %2822 = vmatpush.bf16.msra.mxu0 %v2383
  %2823 = vmatpush.bf16.msra.mxu0 %v2382
  %2824 = vmatpush.bf16.msra.mxu0 %v2381
  %2825 = vmatpush.bf16.msra.mxu0 %v2380
  %2826 = vmatpush.bf16.msra.mxu0 %v2379
  %2827 = vmatpush.bf16.msra.mxu0 %v2378
  %2828 = vmatmul.bf16.gmra.mxu0 %v2504
  %v2829 = vpop.f32.mrf.mxu0
  %v2830 = vadd.f32 %v2811, %v2829
  %v2831 = vpop.f32.mrf.mxu0
  %v2832 = vadd.f32 %v2813, %v2831
  %2833 = vmatmul.bf16.gmra.mxu0 %v2520
  %v2834 = vpop.f32.mrf.mxu0
  %v2835 = vadd.f32 %v2816, %v2834
  %v2836 = vpop.f32.mrf.mxu0
  %v2837 = vadd.f32 %v2818, %v2836
  %2838 = vdwg.mxu0
  %2839 = vmatpush.bf16.msra.mxu0 %v2393
  %2840 = vmatpush.bf16.msra.mxu0 %v2392
  %2841 = vmatpush.bf16.msra.mxu0 %v2391
  %2842 = vmatpush.bf16.msra.mxu0 %v2390
  %2843 = vmatpush.bf16.msra.mxu0 %v2389
  %2844 = vmatpush.bf16.msra.mxu0 %v2388
  %2845 = vmatpush.bf16.msra.mxu0 %v2387
  %2846 = vmatpush.bf16.msra.mxu0 %v2386
  %2847 = vmatmul.bf16.gmra.mxu0 %v2505
  %v2848 = vpop.f32.mrf.mxu0
  %v2849 = vadd.f32 %v2830, %v2848
  %v2850 = vpop.f32.mrf.mxu0
  %v2851 = vadd.f32 %v2832, %v2850
  %2852 = vmatmul.bf16.gmra.mxu0 %v2521
  %v2853 = vpop.f32.mrf.mxu0
  %v2854 = vadd.f32 %v2835, %v2853
  %v2855 = vpop.f32.mrf.mxu0
  %v2856 = vadd.f32 %v2837, %v2855
  %2857 = vdwg.mxu0
  %2860 = vrot.lane.b32.xlu0 %v2854, 16
  %v2861 = vpop.permute.xlu0 %2860
  %2862 = vrot.lane.b32.xlu0 %v2856, 16
  %v2863 = vpop.permute.xlu0 %2862
  %vm2866 = vcmask 130048
  %v2867 = vsel %vm2866, %v2849, %v2861
  %v2868 = vsel %vm2866, %v2851, %v2863
  %v2869 = vpack.c.bf16 %v2868, %v2867
  %v2870 = vld [vmem:[%s3] sm:$0xf]
  %v2871 = vld [vmem:[%s3 + $0x4] sm:$0xf]
  %v2872 = vld [vmem:[%s3 + $0x8] sm:$0xf]
  %v2873 = vld [vmem:[%s3 + $0xc] sm:$0xf]
  %v2874 = vld [vmem:[%s4] sm:$0x1]
  %v2876 = vperm.slane %v2874, 0
  %v2882 = vunpack.c.l.b16 %v2870
  %v2883 = vunpack.c.l.b16 %v2871
  %v2884 = vunpack.c.l.b16 %v2872
  %v2885 = vunpack.c.l.b16 %v2873
  %v2886 = vpack.c.b16 %v2883, %v2882
  %v2887 = vpack.c.b16 %v2885, %v2884
  %vm2890 = vcmask 261120
  %v2892 = vsel %vm2890, %v2869, 0
  %2894 = vmatpush.bf16.msra.mxu0 0
  %2895 = vmatpush.bf16.msra.mxu0 0
  %2896 = vmatpush.bf16.msra.mxu0 0
  %2897 = vmatpush.bf16.msra.mxu0 0
  %2898 = vmatpush.bf16.msra.mxu0 0
  %2899 = vmatpush.bf16.msra.mxu0 0
  %2900 = vmatpush.bf16.msra.mxu0 %v2887
  %2901 = vmatpush.bf16.msra.mxu0 %v2886
  %2902 = vmatmul.bf16.gmra.mxu0 %v2892
  %v2903 = vpop.f32.mrf.mxu0
  %v2904 = vadd.f32 %v2876, %v2903
  %v2905 = vpop.f32.mrf.mxu0
  %v2906 = vadd.f32 %v2876, %v2905
  %2907 = vdwg.mxu0
  %2908 = vst [vmem:[%s5] sm:$0xff] %v2904
  %2909 = vst [vmem:[%s5 + $0x8] sm:$0xff] %v2906
  // Predicated region
  $region22: #{_tdc_apply.1} parent=0 // pred_check
    _
  $region23: #{_tdc_apply.1} parent=0 // pred_check_branch
    %2911 = sbr.rel (0) target = $region25
  $region24: #{_tdc_apply.1} parent=0 // pred_region
    _
  $region25: #{_tdc_apply.1} parent=0 // pred_fallthru
    _
  // Predicated region
  $region26: #{_tdc_apply.1} parent=0 // pred_check
    _
  $region27: #{_tdc_apply.1} parent=0 // pred_check_branch
    %2913 = sbr.rel (0) target = $region29
  $region28: #{_tdc_apply.1} parent=0 // pred_region
    _
  $region29: #{_tdc_apply.1} parent=0 // pred_fallthru
    _

</llo_original>
